<compile_context>
chip_gen: v7x
topology: tpu7x:2x2x1
jax: 0.10.0
libtpu: 0.0.40
codegen_flags: <defaults>
</compile_context>

<pallas_src>
import jax
import jax.numpy as jnp
from jax.experimental import pallas as pl
from jax.experimental.pallas import tpu as pltpu


def make_lstm_kernel(T, B_pad, H):
    """Returns a kernel closed over static T / padded batch / hidden sizes."""

    def lstm_kernel(x_ref, h0_ref, c0_ref, wih_ref, whh_ref, b_ref,
                    wfc_ref, bfc_ref, y_ref, hN_ref, cN_ref):
        # Hoisted, lane-dense input projection for ALL timesteps in one MXU matmul:
        # (T*B_pad, D) @ (D, 4H) + bias.  Gate order i, f, g, o along the 4H lane axis.
        # Kept as a value (a couple of vregs) — no VMEM scratch, no per-step reloads.
        xp = jnp.dot(x_ref[...], wih_ref[...],
                     preferred_element_type=jnp.float32) + b_ref[...]

        whh = whh_ref[...]
        h = h0_ref[...]
        c = c0_ref[...]

        # Lane mask selecting the 'g' gate lanes [2H, 3H) — built once, reused every step.
        lane_ids = jax.lax.broadcasted_iota(jnp.int32, (B_pad, 4 * H), 1)
        is_g = jnp.logical_and(lane_ids >= 2 * H, lane_ids < 3 * H)

        hs = []
        # T is small & static: Python unroll => all xp slices are static, full scheduler view.
        for t in range(T):
            # Single lane-dense recurrent matmul: (B_pad, H) @ (H, 4H) -> (B_pad, 128 lanes).
            gates = xp[t * B_pad:(t + 1) * B_pad, :] + jnp.dot(
                h, whh, preferred_element_type=jnp.float32)
            # Fused activations: one sigmoid + one tanh over all 128 lanes, then lane-select.
            sig = jax.nn.sigmoid(gates)
            tnh = jnp.tanh(gates)
            act = jnp.where(is_g, tnh, sig)
            i_g = act[:, 0 * H:1 * H]
            f_g = act[:, 1 * H:2 * H]
            g_g = act[:, 2 * H:3 * H]
            o_g = act[:, 3 * H:4 * H]
            c = f_g * c + i_g * g_g
            h = o_g * jnp.tanh(c)
            hs.append(h)

        hN_ref[...] = h
        cN_ref[...] = c

        # Un-fused fc over all timesteps at once: (T*B_pad, H) @ (H, 128) + b,
        # single lane-dense (unmasked) store.
        h_all = jnp.concatenate(hs, axis=0)
        y_ref[...] = jnp.dot(h_all, wfc_ref[...],
                             preferred_element_type=jnp.float32) + bfc_ref[...]

    return lstm_kernel


def lstm_forward(x, h0, c0, weight_ih, weight_hh, bias_ih, bias_hh, fc_w, fc_b):
    """x: (B, T, D_in); h0/c0: (B, H); weight_ih: (4H, D_in); weight_hh: (4H, H);
    bias_*: (4H,); fc_w: (O, H); fc_b: (O,).
    Returns (y, (h_n, c_n)) with y: (B*T, O), h_n/c_n: (1, B, H)."""
    B, T, D = x.shape
    H = weight_hh.shape[1]
    O = fc_w.shape[0]

    B_pad = max(8, ((B + 7) // 8) * 8)      # full-sublane batch
    O_pad = max(128, ((O + 127) // 128) * 128)  # lane-dense fc output

    # --- wrapper-side layout glue (padding / transposes / gate concat) ---
    x_p = jnp.zeros((B_pad, T, D), jnp.float32).at[:B].set(x)
    h0_p = jnp.zeros((B_pad, H), jnp.float32).at[:B].set(h0)
    c0_p = jnp.zeros((B_pad, H), jnp.float32).at[:B].set(c0)

    x_tm = jnp.transpose(x_p, (1, 0, 2)).reshape(T * B_pad, D)   # time-major, flat
    wih_cat = weight_ih.T                                        # (D, 4H), gates i,f,g,o
    whh_cat = weight_hh.T                                        # (H, 4H)
    b_cat = (bias_ih + bias_hh)[None, :]                         # (1, 4H)
    wfc_t = jnp.zeros((H, O_pad), jnp.float32).at[:, :O].set(fc_w.T)  # lane-padded
    bfc = jnp.zeros((1, O_pad), jnp.float32).at[:, :O].set(fc_b[None, :])

    kernel = make_lstm_kernel(T, B_pad, H)

    y_tm, hN_p, cN_p = pl.pallas_call(
        kernel,
        out_shape=(
            jax.ShapeDtypeStruct((T * B_pad, O_pad), jnp.float32),
            jax.ShapeDtypeStruct((B_pad, H), jnp.float32),
            jax.ShapeDtypeStruct((B_pad, H), jnp.float32),
        ),
        grid_spec=pltpu.PrefetchScalarGridSpec(
            num_scalar_prefetch=0,
            grid=(1,),
            in_specs=[
                pl.BlockSpec((T * B_pad, D), lambda i: (0, 0)),     # x (time-major, flat)
                pl.BlockSpec((B_pad, H), lambda i: (0, 0)),         # h0
                pl.BlockSpec((B_pad, H), lambda i: (0, 0)),         # c0
                pl.BlockSpec((D, 4 * H), lambda i: (0, 0)),         # W_ih^T (gate-concat)
                pl.BlockSpec((H, 4 * H), lambda i: (0, 0)),         # W_hh^T (gate-concat)
                pl.BlockSpec((1, 4 * H), lambda i: (0, 0)),         # combined gate bias
                pl.BlockSpec((H, O_pad), lambda i: (0, 0)),         # fc weight (T, lane-padded)
                pl.BlockSpec((1, O_pad), lambda i: (0, 0)),         # fc bias (lane-padded)
            ],
            out_specs=[
                pl.BlockSpec((T * B_pad, O_pad), lambda i: (0, 0)), # fc output (time-major)
                pl.BlockSpec((B_pad, H), lambda i: (0, 0)),         # h_n
                pl.BlockSpec((B_pad, H), lambda i: (0, 0)),         # c_n
            ],
        ),
        compiler_params=pltpu.CompilerParams(
            dimension_semantics=("arbitrary",)),
    )(x_tm, h0_p, c0_p, wih_cat, whh_cat, b_cat, wfc_t, bfc)

    # Strip padding and reorder time-major -> batch-major (torch.cat order).
    y = jnp.transpose(
        y_tm.reshape(T, B_pad, O_pad)[:, :B, :O], (1, 0, 2)).reshape(B * T, O)
    hN = hN_p[:B]
    cN = cN_p[:B]
    return y, (hN[None, ...], cN[None, ...])


def lstm_ref(x, h0, c0, weight_ih, weight_hh, bias_ih, bias_hh, fc_w, fc_b):
    """Pure-JAX reference mirroring nn.LSTM(batch_first=True) + Linear."""
    B, T, D = x.shape
    H = h0.shape[-1]

    def step(carry, xt):
        h, c = carry
        gates = xt @ weight_ih.T + bias_ih + h @ weight_hh.T + bias_hh
        i, f, g, o = jnp.split(gates, 4, axis=-1)
        i, f, o = jax.nn.sigmoid(i), jax.nn.sigmoid(f), jax.nn.sigmoid(o)
        g = jnp.tanh(g)
        c = f * c + i * g
        h = o * jnp.tanh(c)
        return (h, c), h

    (hN, cN), hs = jax.lax.scan(step, (h0, c0), jnp.transpose(x, (1, 0, 2)))
    hs = jnp.transpose(hs, (1, 0, 2)).reshape(B * T, H)
    y = hs @ fc_w.T + fc_b
    return y, hN, cN


if __name__ == "__main__":
    # Small shapes implied by the module: input_dim, hidden_dim, output_dim, seq, batch.
    B, T = 2, 8
    input_dim, hidden_dim, output_dim = 4, 32, 3

    key = jax.random.PRNGKey(0)
    ks = jax.random.split(key, 8)
    scale = 1.0 / jnp.sqrt(hidden_dim)

    x = jax.random.normal(ks[0], (B, T, input_dim), dtype=jnp.float32)
    h0 = jnp.zeros((B, hidden_dim), dtype=jnp.float32)
    c0 = jnp.zeros((B, hidden_dim), dtype=jnp.float32)

    weight_ih = jax.random.uniform(ks[1], (4 * hidden_dim, input_dim),
                                   minval=-scale, maxval=scale, dtype=jnp.float32)
    weight_hh = jax.random.uniform(ks[2], (4 * hidden_dim, hidden_dim),
                                   minval=-scale, maxval=scale, dtype=jnp.float32)
    bias_ih = jax.random.uniform(ks[3], (4 * hidden_dim,),
                                 minval=-scale, maxval=scale, dtype=jnp.float32)
    bias_hh = jax.random.uniform(ks[4], (4 * hidden_dim,),
                                 minval=-scale, maxval=scale, dtype=jnp.float32)
    fc_w = jax.random.uniform(ks[5], (output_dim, hidden_dim),
                              minval=-scale, maxval=scale, dtype=jnp.float32)
    fc_b = jax.random.uniform(ks[6], (output_dim,),
                              minval=-scale, maxval=scale, dtype=jnp.float32)

    y, (hN, cN) = lstm_forward(x, h0, c0, weight_ih, weight_hh,
                               bias_ih, bias_hh, fc_w, fc_b)
    jax.block_until_ready(y)

    # Correctness check against pure-JAX reference.
    y_ref, hN_ref, cN_ref = lstm_ref(x, h0, c0, weight_ih, weight_hh,
                                     bias_ih, bias_hh, fc_w, fc_b)
    assert y.shape == (B * T, output_dim)
    assert hN.shape == (1, B, hidden_dim) and cN.shape == (1, B, hidden_dim)
    assert jnp.allclose(y, y_ref, rtol=1e-5, atol=1e-5)
    assert jnp.allclose(hN[0], hN_ref, rtol=1e-5, atol=1e-5)
    assert jnp.allclose(cN[0], cN_ref, rtol=1e-5, atol=1e-5)

    print("KERNEL_OK")
</pallas_src>

<mosaic_0001>
module attributes {stable_mosaic.version = 11 : i64} {
  func.func @lstm_kernel(%arg0: i32, %arg1: memref<64x4xf32, #tpu.memory_space<vmem>>, %arg2: memref<8x32xf32, #tpu.memory_space<vmem>>, %arg3: memref<8x32xf32, #tpu.memory_space<vmem>>, %arg4: memref<4x128xf32, #tpu.memory_space<vmem>>, %arg5: memref<32x128xf32, #tpu.memory_space<vmem>>, %arg6: memref<1x128xf32, #tpu.memory_space<vmem>>, %arg7: memref<32x128xf32, #tpu.memory_space<vmem>>, %arg8: memref<1x128xf32, #tpu.memory_space<vmem>>, %arg9: memref<64x128xf32, #tpu.memory_space<vmem>>, %arg10: memref<8x32xf32, #tpu.memory_space<vmem>>, %arg11: memref<8x32xf32, #tpu.memory_space<vmem>>) attributes {dimension_semantics = [#tpu.dimension_semantics<arbitrary>], iteration_bounds = array<i64: 1>, scalar_prefetch = 0 : i64, scratch_operands = 0 : i64, tpu.core_type = #tpu.core_type<tc>, window_params = [{pipeline_mode = #tpu.pipeline_mode<synchronous>, transform_indices = @transform_0, window_bounds = array<i64: 64, 4>}, {pipeline_mode = #tpu.pipeline_mode<synchronous>, transform_indices = @transform_1, window_bounds = array<i64: 8, 32>}, {pipeline_mode = #tpu.pipeline_mode<synchronous>, transform_indices = @transform_2, window_bounds = array<i64: 8, 32>}, {pipeline_mode = #tpu.pipeline_mode<synchronous>, transform_indices = @transform_3, window_bounds = array<i64: 4, 128>}, {pipeline_mode = #tpu.pipeline_mode<synchronous>, transform_indices = @transform_4, window_bounds = array<i64: 32, 128>}, {pipeline_mode = #tpu.pipeline_mode<synchronous>, transform_indices = @transform_5, window_bounds = array<i64: 1, 128>}, {pipeline_mode = #tpu.pipeline_mode<synchronous>, transform_indices = @transform_6, window_bounds = array<i64: 32, 128>}, {pipeline_mode = #tpu.pipeline_mode<synchronous>, transform_indices = @transform_7, window_bounds = array<i64: 1, 128>}, {pipeline_mode = #tpu.pipeline_mode<synchronous>, transform_indices = @transform_8, window_bounds = array<i64: 64, 128>}, {pipeline_mode = #tpu.pipeline_mode<synchronous>, transform_indices = @transform_9, window_bounds = array<i64: 8, 32>}, {pipeline_mode = #tpu.pipeline_mode<synchronous>, transform_indices = @transform_10, window_bounds = array<i64: 8, 32>}]} {
    %c0 = arith.constant 0 : index
    %c0_0 = arith.constant 0 : index
    %0 = vector.load %arg1[%c0, %c0_0] : memref<64x4xf32, #tpu.memory_space<vmem>>, vector<64x4xf32>
    %c0_1 = arith.constant 0 : index
    %c0_2 = arith.constant 0 : index
    %1 = vector.load %arg4[%c0_1, %c0_2] : memref<4x128xf32, #tpu.memory_space<vmem>>, vector<4x128xf32>
    %cst = arith.constant dense<0.000000e+00> : vector<64x128xf32>
    %2 = tpu.matmul %0, %1, %cst {dimension_numbers = #tpu.dot_dimension_numbers<[1], [0], [0], [1], [0, 0, 1, 1], [], []>} : vector<64x4xf32>, vector<4x128xf32>, vector<64x128xf32> -> vector<64x128xf32>
    %c0_3 = arith.constant 0 : index
    %c0_4 = arith.constant 0 : index
    %3 = vector.load %arg6[%c0_3, %c0_4] : memref<1x128xf32, #tpu.memory_space<vmem>>, vector<1x128xf32>
    %4 = vector.broadcast %3 : vector<1x128xf32> to vector<64x128xf32>
    %5 = arith.addf %2, %4 : vector<64x128xf32>
    %c0_5 = arith.constant 0 : index
    %c0_6 = arith.constant 0 : index
    %6 = vector.load %arg5[%c0_5, %c0_6] : memref<32x128xf32, #tpu.memory_space<vmem>>, vector<32x128xf32>
    %c0_7 = arith.constant 0 : index
    %c0_8 = arith.constant 0 : index
    %7 = vector.load %arg2[%c0_7, %c0_8] : memref<8x32xf32, #tpu.memory_space<vmem>>, vector<8x32xf32>
    %c0_9 = arith.constant 0 : index
    %c0_10 = arith.constant 0 : index
    %8 = vector.load %arg3[%c0_9, %c0_10] : memref<8x32xf32, #tpu.memory_space<vmem>>, vector<8x32xf32>
    %9 = tpu.iota {dimensions = array<i32: 1>} : vector<8x128xi32>
    %c64_i32 = arith.constant 64 : i32
    %10 = vector.broadcast %c64_i32 : i32 to vector<8x128xi32>
    %11 = arith.cmpi sge, %9, %10 : vector<8x128xi32>
    %c96_i32 = arith.constant 96 : i32
    %12 = vector.broadcast %c96_i32 : i32 to vector<8x128xi32>
    %13 = arith.cmpi slt, %9, %12 : vector<8x128xi32>
    %14 = arith.andi %11, %13 : vector<8x128xi1>
    %15 = vector.extract_strided_slice %5 {offsets = [0, 0], sizes = [8, 128], strides = [1, 1]} : vector<64x128xf32> to vector<8x128xf32>
    %cst_11 = arith.constant dense<0.000000e+00> : vector<8x128xf32>
    %16 = tpu.matmul %7, %6, %cst_11 {dimension_numbers = #tpu.dot_dimension_numbers<[1], [0], [0], [1], [0, 0, 1, 1], [], []>} : vector<8x32xf32>, vector<32x128xf32>, vector<8x128xf32> -> vector<8x128xf32>
    %17 = arith.addf %15, %16 : vector<8x128xf32>
    %18 = arith.negf %17 : vector<8x128xf32>
    %19 = math.exp %18 : vector<8x128xf32>
    %cst_12 = arith.constant 1.000000e+00 : f32
    %20 = vector.broadcast %cst_12 : f32 to vector<8x128xf32>
    %21 = arith.addf %20, %19 : vector<8x128xf32>
    %22 = arith.divf %20, %21 : vector<8x128xf32>
    %23 = math.tanh %17 : vector<8x128xf32>
    %24 = arith.select %14, %23, %22 : vector<8x128xi1>, vector<8x128xf32>
    %25 = vector.extract_strided_slice %24 {offsets = [0, 0], sizes = [8, 32], strides = [1, 1]} : vector<8x128xf32> to vector<8x32xf32>
    %26 = vector.extract_strided_slice %24 {offsets = [0, 32], sizes = [8, 32], strides = [1, 1]} : vector<8x128xf32> to vector<8x32xf32>
    %27 = vector.extract_strided_slice %24 {offsets = [0, 64], sizes = [8, 32], strides = [1, 1]} : vector<8x128xf32> to vector<8x32xf32>
    %28 = vector.extract_strided_slice %24 {offsets = [0, 96], sizes = [8, 32], strides = [1, 1]} : vector<8x128xf32> to vector<8x32xf32>
    %29 = arith.mulf %26, %8 : vector<8x32xf32>
    %30 = arith.mulf %25, %27 : vector<8x32xf32>
    %31 = arith.addf %29, %30 : vector<8x32xf32>
    %32 = math.tanh %31 : vector<8x32xf32>
    %33 = arith.mulf %28, %32 : vector<8x32xf32>
    %34 = vector.extract_strided_slice %5 {offsets = [8, 0], sizes = [8, 128], strides = [1, 1]} : vector<64x128xf32> to vector<8x128xf32>
    %cst_13 = arith.constant dense<0.000000e+00> : vector<8x128xf32>
    %35 = tpu.matmul %33, %6, %cst_13 {dimension_numbers = #tpu.dot_dimension_numbers<[1], [0], [0], [1], [0, 0, 1, 1], [], []>} : vector<8x32xf32>, vector<32x128xf32>, vector<8x128xf32> -> vector<8x128xf32>
    %36 = arith.addf %34, %35 : vector<8x128xf32>
    %37 = arith.negf %36 : vector<8x128xf32>
    %38 = math.exp %37 : vector<8x128xf32>
    %cst_14 = arith.constant 1.000000e+00 : f32
    %39 = vector.broadcast %cst_14 : f32 to vector<8x128xf32>
    %40 = arith.addf %39, %38 : vector<8x128xf32>
    %41 = arith.divf %39, %40 : vector<8x128xf32>
    %42 = math.tanh %36 : vector<8x128xf32>
    %43 = arith.select %14, %42, %41 : vector<8x128xi1>, vector<8x128xf32>
    %44 = vector.extract_strided_slice %43 {offsets = [0, 0], sizes = [8, 32], strides = [1, 1]} : vector<8x128xf32> to vector<8x32xf32>
    %45 = vector.extract_strided_slice %43 {offsets = [0, 32], sizes = [8, 32], strides = [1, 1]} : vector<8x128xf32> to vector<8x32xf32>
    %46 = vector.extract_strided_slice %43 {offsets = [0, 64], sizes = [8, 32], strides = [1, 1]} : vector<8x128xf32> to vector<8x32xf32>
    %47 = vector.extract_strided_slice %43 {offsets = [0, 96], sizes = [8, 32], strides = [1, 1]} : vector<8x128xf32> to vector<8x32xf32>
    %48 = arith.mulf %45, %31 : vector<8x32xf32>
    %49 = arith.mulf %44, %46 : vector<8x32xf32>
    %50 = arith.addf %48, %49 : vector<8x32xf32>
    %51 = math.tanh %50 : vector<8x32xf32>
    %52 = arith.mulf %47, %51 : vector<8x32xf32>
    %53 = vector.extract_strided_slice %5 {offsets = [16, 0], sizes = [8, 128], strides = [1, 1]} : vector<64x128xf32> to vector<8x128xf32>
    %cst_15 = arith.constant dense<0.000000e+00> : vector<8x128xf32>
    %54 = tpu.matmul %52, %6, %cst_15 {dimension_numbers = #tpu.dot_dimension_numbers<[1], [0], [0], [1], [0, 0, 1, 1], [], []>} : vector<8x32xf32>, vector<32x128xf32>, vector<8x128xf32> -> vector<8x128xf32>
    %55 = arith.addf %53, %54 : vector<8x128xf32>
    %56 = arith.negf %55 : vector<8x128xf32>
    %57 = math.exp %56 : vector<8x128xf32>
    %cst_16 = arith.constant 1.000000e+00 : f32
    %58 = vector.broadcast %cst_16 : f32 to vector<8x128xf32>
    %59 = arith.addf %58, %57 : vector<8x128xf32>
    %60 = arith.divf %58, %59 : vector<8x128xf32>
    %61 = math.tanh %55 : vector<8x128xf32>
    %62 = arith.select %14, %61, %60 : vector<8x128xi1>, vector<8x128xf32>
    %63 = vector.extract_strided_slice %62 {offsets = [0, 0], sizes = [8, 32], strides = [1, 1]} : vector<8x128xf32> to vector<8x32xf32>
    %64 = vector.extract_strided_slice %62 {offsets = [0, 32], sizes = [8, 32], strides = [1, 1]} : vector<8x128xf32> to vector<8x32xf32>
    %65 = vector.extract_strided_slice %62 {offsets = [0, 64], sizes = [8, 32], strides = [1, 1]} : vector<8x128xf32> to vector<8x32xf32>
    %66 = vector.extract_strided_slice %62 {offsets = [0, 96], sizes = [8, 32], strides = [1, 1]} : vector<8x128xf32> to vector<8x32xf32>
    %67 = arith.mulf %64, %50 : vector<8x32xf32>
    %68 = arith.mulf %63, %65 : vector<8x32xf32>
    %69 = arith.addf %67, %68 : vector<8x32xf32>
    %70 = math.tanh %69 : vector<8x32xf32>
    %71 = arith.mulf %66, %70 : vector<8x32xf32>
    %72 = vector.extract_strided_slice %5 {offsets = [24, 0], sizes = [8, 128], strides = [1, 1]} : vector<64x128xf32> to vector<8x128xf32>
    %cst_17 = arith.constant dense<0.000000e+00> : vector<8x128xf32>
    %73 = tpu.matmul %71, %6, %cst_17 {dimension_numbers = #tpu.dot_dimension_numbers<[1], [0], [0], [1], [0, 0, 1, 1], [], []>} : vector<8x32xf32>, vector<32x128xf32>, vector<8x128xf32> -> vector<8x128xf32>
    %74 = arith.addf %72, %73 : vector<8x128xf32>
    %75 = arith.negf %74 : vector<8x128xf32>
    %76 = math.exp %75 : vector<8x128xf32>
    %cst_18 = arith.constant 1.000000e+00 : f32
    %77 = vector.broadcast %cst_18 : f32 to vector<8x128xf32>
    %78 = arith.addf %77, %76 : vector<8x128xf32>
    %79 = arith.divf %77, %78 : vector<8x128xf32>
    %80 = math.tanh %74 : vector<8x128xf32>
    %81 = arith.select %14, %80, %79 : vector<8x128xi1>, vector<8x128xf32>
    %82 = vector.extract_strided_slice %81 {offsets = [0, 0], sizes = [8, 32], strides = [1, 1]} : vector<8x128xf32> to vector<8x32xf32>
    %83 = vector.extract_strided_slice %81 {offsets = [0, 32], sizes = [8, 32], strides = [1, 1]} : vector<8x128xf32> to vector<8x32xf32>
    %84 = vector.extract_strided_slice %81 {offsets = [0, 64], sizes = [8, 32], strides = [1, 1]} : vector<8x128xf32> to vector<8x32xf32>
    %85 = vector.extract_strided_slice %81 {offsets = [0, 96], sizes = [8, 32], strides = [1, 1]} : vector<8x128xf32> to vector<8x32xf32>
    %86 = arith.mulf %83, %69 : vector<8x32xf32>
    %87 = arith.mulf %82, %84 : vector<8x32xf32>
    %88 = arith.addf %86, %87 : vector<8x32xf32>
    %89 = math.tanh %88 : vector<8x32xf32>
    %90 = arith.mulf %85, %89 : vector<8x32xf32>
    %91 = vector.extract_strided_slice %5 {offsets = [32, 0], sizes = [8, 128], strides = [1, 1]} : vector<64x128xf32> to vector<8x128xf32>
    %cst_19 = arith.constant dense<0.000000e+00> : vector<8x128xf32>
    %92 = tpu.matmul %90, %6, %cst_19 {dimension_numbers = #tpu.dot_dimension_numbers<[1], [0], [0], [1], [0, 0, 1, 1], [], []>} : vector<8x32xf32>, vector<32x128xf32>, vector<8x128xf32> -> vector<8x128xf32>
    %93 = arith.addf %91, %92 : vector<8x128xf32>
    %94 = arith.negf %93 : vector<8x128xf32>
    %95 = math.exp %94 : vector<8x128xf32>
    %cst_20 = arith.constant 1.000000e+00 : f32
    %96 = vector.broadcast %cst_20 : f32 to vector<8x128xf32>
    %97 = arith.addf %96, %95 : vector<8x128xf32>
    %98 = arith.divf %96, %97 : vector<8x128xf32>
    %99 = math.tanh %93 : vector<8x128xf32>
    %100 = arith.select %14, %99, %98 : vector<8x128xi1>, vector<8x128xf32>
    %101 = vector.extract_strided_slice %100 {offsets = [0, 0], sizes = [8, 32], strides = [1, 1]} : vector<8x128xf32> to vector<8x32xf32>
    %102 = vector.extract_strided_slice %100 {offsets = [0, 32], sizes = [8, 32], strides = [1, 1]} : vector<8x128xf32> to vector<8x32xf32>
    %103 = vector.extract_strided_slice %100 {offsets = [0, 64], sizes = [8, 32], strides = [1, 1]} : vector<8x128xf32> to vector<8x32xf32>
    %104 = vector.extract_strided_slice %100 {offsets = [0, 96], sizes = [8, 32], strides = [1, 1]} : vector<8x128xf32> to vector<8x32xf32>
    %105 = arith.mulf %102, %88 : vector<8x32xf32>
    %106 = arith.mulf %101, %103 : vector<8x32xf32>
    %107 = arith.addf %105, %106 : vector<8x32xf32>
    %108 = math.tanh %107 : vector<8x32xf32>
    %109 = arith.mulf %104, %108 : vector<8x32xf32>
    %110 = vector.extract_strided_slice %5 {offsets = [40, 0], sizes = [8, 128], strides = [1, 1]} : vector<64x128xf32> to vector<8x128xf32>
    %cst_21 = arith.constant dense<0.000000e+00> : vector<8x128xf32>
    %111 = tpu.matmul %109, %6, %cst_21 {dimension_numbers = #tpu.dot_dimension_numbers<[1], [0], [0], [1], [0, 0, 1, 1], [], []>} : vector<8x32xf32>, vector<32x128xf32>, vector<8x128xf32> -> vector<8x128xf32>
    %112 = arith.addf %110, %111 : vector<8x128xf32>
    %113 = arith.negf %112 : vector<8x128xf32>
    %114 = math.exp %113 : vector<8x128xf32>
    %cst_22 = arith.constant 1.000000e+00 : f32
    %115 = vector.broadcast %cst_22 : f32 to vector<8x128xf32>
    %116 = arith.addf %115, %114 : vector<8x128xf32>
    %117 = arith.divf %115, %116 : vector<8x128xf32>
    %118 = math.tanh %112 : vector<8x128xf32>
    %119 = arith.select %14, %118, %117 : vector<8x128xi1>, vector<8x128xf32>
    %120 = vector.extract_strided_slice %119 {offsets = [0, 0], sizes = [8, 32], strides = [1, 1]} : vector<8x128xf32> to vector<8x32xf32>
    %121 = vector.extract_strided_slice %119 {offsets = [0, 32], sizes = [8, 32], strides = [1, 1]} : vector<8x128xf32> to vector<8x32xf32>
    %122 = vector.extract_strided_slice %119 {offsets = [0, 64], sizes = [8, 32], strides = [1, 1]} : vector<8x128xf32> to vector<8x32xf32>
    %123 = vector.extract_strided_slice %119 {offsets = [0, 96], sizes = [8, 32], strides = [1, 1]} : vector<8x128xf32> to vector<8x32xf32>
    %124 = arith.mulf %121, %107 : vector<8x32xf32>
    %125 = arith.mulf %120, %122 : vector<8x32xf32>
    %126 = arith.addf %124, %125 : vector<8x32xf32>
    %127 = math.tanh %126 : vector<8x32xf32>
    %128 = arith.mulf %123, %127 : vector<8x32xf32>
    %129 = vector.extract_strided_slice %5 {offsets = [48, 0], sizes = [8, 128], strides = [1, 1]} : vector<64x128xf32> to vector<8x128xf32>
    %cst_23 = arith.constant dense<0.000000e+00> : vector<8x128xf32>
    %130 = tpu.matmul %128, %6, %cst_23 {dimension_numbers = #tpu.dot_dimension_numbers<[1], [0], [0], [1], [0, 0, 1, 1], [], []>} : vector<8x32xf32>, vector<32x128xf32>, vector<8x128xf32> -> vector<8x128xf32>
    %131 = arith.addf %129, %130 : vector<8x128xf32>
    %132 = arith.negf %131 : vector<8x128xf32>
    %133 = math.exp %132 : vector<8x128xf32>
    %cst_24 = arith.constant 1.000000e+00 : f32
    %134 = vector.broadcast %cst_24 : f32 to vector<8x128xf32>
    %135 = arith.addf %134, %133 : vector<8x128xf32>
    %136 = arith.divf %134, %135 : vector<8x128xf32>
    %137 = math.tanh %131 : vector<8x128xf32>
    %138 = arith.select %14, %137, %136 : vector<8x128xi1>, vector<8x128xf32>
    %139 = vector.extract_strided_slice %138 {offsets = [0, 0], sizes = [8, 32], strides = [1, 1]} : vector<8x128xf32> to vector<8x32xf32>
    %140 = vector.extract_strided_slice %138 {offsets = [0, 32], sizes = [8, 32], strides = [1, 1]} : vector<8x128xf32> to vector<8x32xf32>
    %141 = vector.extract_strided_slice %138 {offsets = [0, 64], sizes = [8, 32], strides = [1, 1]} : vector<8x128xf32> to vector<8x32xf32>
    %142 = vector.extract_strided_slice %138 {offsets = [0, 96], sizes = [8, 32], strides = [1, 1]} : vector<8x128xf32> to vector<8x32xf32>
    %143 = arith.mulf %140, %126 : vector<8x32xf32>
    %144 = arith.mulf %139, %141 : vector<8x32xf32>
    %145 = arith.addf %143, %144 : vector<8x32xf32>
    %146 = math.tanh %145 : vector<8x32xf32>
    %147 = arith.mulf %142, %146 : vector<8x32xf32>
    %148 = vector.extract_strided_slice %5 {offsets = [56, 0], sizes = [8, 128], strides = [1, 1]} : vector<64x128xf32> to vector<8x128xf32>
    %cst_25 = arith.constant dense<0.000000e+00> : vector<8x128xf32>
    %149 = tpu.matmul %147, %6, %cst_25 {dimension_numbers = #tpu.dot_dimension_numbers<[1], [0], [0], [1], [0, 0, 1, 1], [], []>} : vector<8x32xf32>, vector<32x128xf32>, vector<8x128xf32> -> vector<8x128xf32>
    %150 = arith.addf %148, %149 : vector<8x128xf32>
    %151 = arith.negf %150 : vector<8x128xf32>
    %152 = math.exp %151 : vector<8x128xf32>
    %cst_26 = arith.constant 1.000000e+00 : f32
    %153 = vector.broadcast %cst_26 : f32 to vector<8x128xf32>
    %154 = arith.addf %153, %152 : vector<8x128xf32>
    %155 = arith.divf %153, %154 : vector<8x128xf32>
    %156 = math.tanh %150 : vector<8x128xf32>
    %157 = arith.select %14, %156, %155 : vector<8x128xi1>, vector<8x128xf32>
    %158 = vector.extract_strided_slice %157 {offsets = [0, 0], sizes = [8, 32], strides = [1, 1]} : vector<8x128xf32> to vector<8x32xf32>
    %159 = vector.extract_strided_slice %157 {offsets = [0, 32], sizes = [8, 32], strides = [1, 1]} : vector<8x128xf32> to vector<8x32xf32>
    %160 = vector.extract_strided_slice %157 {offsets = [0, 64], sizes = [8, 32], strides = [1, 1]} : vector<8x128xf32> to vector<8x32xf32>
    %161 = vector.extract_strided_slice %157 {offsets = [0, 96], sizes = [8, 32], strides = [1, 1]} : vector<8x128xf32> to vector<8x32xf32>
    %162 = arith.mulf %159, %145 : vector<8x32xf32>
    %163 = arith.mulf %158, %160 : vector<8x32xf32>
    %164 = arith.addf %162, %163 : vector<8x32xf32>
    %165 = math.tanh %164 : vector<8x32xf32>
    %166 = arith.mulf %161, %165 : vector<8x32xf32>
    %c0_27 = arith.constant 0 : index
    %c0_28 = arith.constant 0 : index
    %167 = vector.load %arg10[%c0_27, %c0_28] : memref<8x32xf32, #tpu.memory_space<vmem>>, vector<8x32xf32>
    tpu.vector_store %arg10[%c0_27, %c0_28], %166 {strides = array<i32>} : memref<8x32xf32, #tpu.memory_space<vmem>>, vector<8x32xf32>,
    %c0_29 = arith.constant 0 : index
    %c0_30 = arith.constant 0 : index
    %168 = vector.load %arg11[%c0_29, %c0_30] : memref<8x32xf32, #tpu.memory_space<vmem>>, vector<8x32xf32>
    tpu.vector_store %arg11[%c0_29, %c0_30], %164 {strides = array<i32>} : memref<8x32xf32, #tpu.memory_space<vmem>>, vector<8x32xf32>,
    %169 = tpu.concatenate %33, %52, %71, %90, %109, %128, %147, %166 in 0 : vector<8x32xf32>, vector<8x32xf32>, vector<8x32xf32>, vector<8x32xf32>, vector<8x32xf32>, vector<8x32xf32>, vector<8x32xf32>, vector<8x32xf32> -> vector<64x32xf32>
    %c0_31 = arith.constant 0 : index
    %c0_32 = arith.constant 0 : index
    %170 = vector.load %arg7[%c0_31, %c0_32] : memref<32x128xf32, #tpu.memory_space<vmem>>, vector<32x128xf32>
    %cst_33 = arith.constant dense<0.000000e+00> : vector<64x128xf32>
    %171 = tpu.matmul %169, %170, %cst_33 {dimension_numbers = #tpu.dot_dimension_numbers<[1], [0], [0], [1], [0, 0, 1, 1], [], []>} : vector<64x32xf32>, vector<32x128xf32>, vector<64x128xf32> -> vector<64x128xf32>
    %c0_34 = arith.constant 0 : index
    %c0_35 = arith.constant 0 : index
    %172 = vector.load %arg8[%c0_34, %c0_35] : memref<1x128xf32, #tpu.memory_space<vmem>>, vector<1x128xf32>
    %173 = vector.broadcast %172 : vector<1x128xf32> to vector<64x128xf32>
    %174 = arith.addf %171, %173 : vector<64x128xf32>
    %c0_36 = arith.constant 0 : index
    %c0_37 = arith.constant 0 : index
    %175 = vector.load %arg9[%c0_36, %c0_37] : memref<64x128xf32, #tpu.memory_space<vmem>>, vector<64x128xf32>
    tpu.vector_store %arg9[%c0_36, %c0_37], %174 {strides = array<i32>} : memref<64x128xf32, #tpu.memory_space<vmem>>, vector<64x128xf32>,
    return
  }
  func.func @transform_0(%arg0: i32) -> (i32, i32) {
    %c0_i32 = arith.constant 0 : i32
    %c0_i32_0 = arith.constant 0 : i32
    %c0_i32_1 = arith.constant 0 : i32
    return %c0_i32, %c0_i32_0 : i32, i32
  }
  func.func @transform_1(%arg0: i32) -> (i32, i32) {
    %c0_i32 = arith.constant 0 : i32
    %c0_i32_0 = arith.constant 0 : i32
    %c0_i32_1 = arith.constant 0 : i32
    return %c0_i32, %c0_i32_0 : i32, i32
  }
  func.func @transform_2(%arg0: i32) -> (i32, i32) {
    %c0_i32 = arith.constant 0 : i32
    %c0_i32_0 = arith.constant 0 : i32
    %c0_i32_1 = arith.constant 0 : i32
    return %c0_i32, %c0_i32_0 : i32, i32
  }
  func.func @transform_3(%arg0: i32) -> (i32, i32) {
    %c0_i32 = arith.constant 0 : i32
    %c0_i32_0 = arith.constant 0 : i32
    %c0_i32_1 = arith.constant 0 : i32
    return %c0_i32, %c0_i32_0 : i32, i32
  }
  func.func @transform_4(%arg0: i32) -> (i32, i32) {
    %c0_i32 = arith.constant 0 : i32
    %c0_i32_0 = arith.constant 0 : i32
    %c0_i32_1 = arith.constant 0 : i32
    return %c0_i32, %c0_i32_0 : i32, i32
  }
  func.func @transform_5(%arg0: i32) -> (i32, i32) {
    %c0_i32 = arith.constant 0 : i32
    %c0_i32_0 = arith.constant 0 : i32
    %c0_i32_1 = arith.constant 0 : i32
    return %c0_i32, %c0_i32_0 : i32, i32
  }
  func.func @transform_6(%arg0: i32) -> (i32, i32) {
    %c0_i32 = arith.constant 0 : i32
    %c0_i32_0 = arith.constant 0 : i32
    %c0_i32_1 = arith.constant 0 : i32
    return %c0_i32, %c0_i32_0 : i32, i32
  }
  func.func @transform_7(%arg0: i32) -> (i32, i32) {
    %c0_i32 = arith.constant 0 : i32
    %c0_i32_0 = arith.constant 0 : i32
    %c0_i32_1 = arith.constant 0 : i32
    return %c0_i32, %c0_i32_0 : i32, i32
  }
  func.func @transform_8(%arg0: i32) -> (i32, i32) {
    %c0_i32 = arith.constant 0 : i32
    %c0_i32_0 = arith.constant 0 : i32
    %c0_i32_1 = arith.constant 0 : i32
    return %c0_i32, %c0_i32_0 : i32, i32
  }
  func.func @transform_9(%arg0: i32) -> (i32, i32) {
    %c0_i32 = arith.constant 0 : i32
    %c0_i32_0 = arith.constant 0 : i32
    %c0_i32_1 = arith.constant 0 : i32
    return %c0_i32, %c0_i32_0 : i32, i32
  }
  func.func @transform_10(%arg0: i32) -> (i32, i32) {
    %c0_i32 = arith.constant 0 : i32
    %c0_i32_0 = arith.constant 0 : i32
    %c0_i32_1 = arith.constant 0 : i32
    return %c0_i32, %c0_i32_0 : i32, i32
  }
}

</mosaic_0001>

<llo_original>
// kernel: tpu_custom_call.1
$region0: #{tpu_custom_call.1}
  #allocation0 [shape = 'u32[]', space=smem, size = 0x4, offset = 0x4, fixed_abs, tag = 'smem constant byte address 0x4 - core index']
  #allocation1 [shape = 'u32[144,128]{1,0:T(1,128)}', space=vmem, size = 0x12000, scoped, tag = 'internal scratch']
  %s0 = inlined_call_operand.vmem [shape: f32[64,4], index: 0, kind: input, shape index: {}]
  %s1 = inlined_call_operand.hbm [shape: f32[8,32], index: 1, kind: input, shape index: {}]
  %s2 = inlined_call_operand.vmem [shape: f32[8,32], index: 2, kind: input, shape index: {}]
  %s3 = inlined_call_operand.vmem [shape: f32[4,128], index: 3, kind: input, shape index: {}]
  %s4 = inlined_call_operand.vmem [shape: f32[32,128], index: 4, kind: input, shape index: {}]
  %s5 = inlined_call_operand.vmem [shape: f32[1,128], index: 5, kind: input, shape index: {}]
  %s6 = inlined_call_operand.vmem [shape: f32[32,128], index: 6, kind: input, shape index: {}]
  %s7 = inlined_call_operand.vmem [shape: f32[1,128], index: 7, kind: input, shape index: {}]
  %s8 = inlined_call_operand.hbm [shape: f32[64,128], index: 8, kind: output, shape index: {0}]
  %s9 = inlined_call_operand.hbm [shape: f32[8,32], index: 9, kind: output, shape index: {1}]
  %s10 = inlined_call_operand.hbm [shape: f32[8,32], index: 10, kind: output, shape index: {2}]
  %11 = xla_tuple %s8, %s9, %s10
  %s12 = sld [smem:[#allocation0]]
  $region62: #{tpu_custom_call.1} parent=0
    _
  %s14 = ssub.s32 1, %s12
  %s15 = scalar_select 0, %s14, %s12
  $region1: #{tpu_custom_call.1} parent=0
    #allocation2 [shape = 'u8[4096]{0}', space=vmem, size = 0x1000, scoped, tag = 'input window, operand 1, single buffered']
    #allocation3 [shape = 's32[1]{0}', space=sflag, size = 0x4, scoped, tag = 'scoped memory for tpu_custom_call.1']
    #allocation4 [shape = 's32[1]{0}', space=sflag, size = 0x4, scoped, tag = 'scoped memory for tpu_custom_call.1']
    #allocation5 [shape = 'u8[32768]{0}', space=vmem, size = 0x8000, scoped, tag = 'output window, operand 0, single buffered']
    #allocation6 [shape = 'u8[4096]{0}', space=vmem, size = 0x1000, scoped, tag = 'output window, operand 1, single buffered']
    #allocation7 [shape = 's32[1]{0}', space=sflag, size = 0x4, scoped, tag = 'scoped memory for tpu_custom_call.1']
    #allocation8 [shape = 'u8[4096]{0}', space=vmem, size = 0x1000, scoped, tag = 'output window, operand 2, single buffered']
    %16 = vsyncpa [#allocation3], 0
    %17 = vsyncpa [#allocation4], 0
    %18 = vsyncpa [#allocation7], 0
    // Predicated region
    $region2: #{tpu_custom_call.1} parent=1 // pred_check
      _
    $region3: #{tpu_custom_call.1} parent=1 // pred_check_branch
      %20 = sbr.rel (0) target = $region5
    $region4: #{tpu_custom_call.1} parent=1 // pred_region
      _
    $region5: #{tpu_custom_call.1} parent=1 // pred_fallthru
      _
    // Predicated region
    $region6: #{tpu_custom_call.1} parent=1 // pred_check
      _
    $region7: #{tpu_custom_call.1} parent=1 // pred_check_branch
      %22 = sbr.rel (0) target = $region9
    $region8: #{tpu_custom_call.1} parent=1 // pred_region
      %s24 = ssub.s32 128, 128
      %25 = vsyncadd [#allocation3], %s24
      %s27 = sshll.u32 [#allocation2], 4
      %s28 = int_to_ptr.vmem [resolvable:$true] %s27
      %30 = dma.hbm_to_vmem [thread:$0]  %s1, 128, %s28, [#allocation3]
    $region9: #{tpu_custom_call.1} parent=1 // pred_fallthru
      _
    // Predicated region
    $region10: #{tpu_custom_call.1} parent=1 // pred_check
      _
    $region11: #{tpu_custom_call.1} parent=1 // pred_check_branch
      %32 = sbr.rel (0) target = $region13
    $region12: #{tpu_custom_call.1} parent=1 // pred_region
      _
    $region13: #{tpu_custom_call.1} parent=1 // pred_fallthru
      _
    // Predicated region
    $region14: #{tpu_custom_call.1} parent=1 // pred_check
      _
    $region15: #{tpu_custom_call.1} parent=1 // pred_check_branch
      %34 = sbr.rel (0) target = $region17
    $region16: #{tpu_custom_call.1} parent=1 // pred_region
      _
    $region17: #{tpu_custom_call.1} parent=1 // pred_fallthru
      _
    // Predicated region
    $region18: #{tpu_custom_call.1} parent=1 // pred_check
      _
    $region19: #{tpu_custom_call.1} parent=1 // pred_check_branch
      %36 = sbr.rel (0) target = $region21
    $region20: #{tpu_custom_call.1} parent=1 // pred_region
      _
    $region21: #{tpu_custom_call.1} parent=1 // pred_fallthru
      _
    // Predicated region
    $region22: #{tpu_custom_call.1} parent=1 // pred_check
      _
    $region23: #{tpu_custom_call.1} parent=1 // pred_check_branch
      %38 = sbr.rel (0) target = $region25
    $region24: #{tpu_custom_call.1} parent=1 // pred_region
      _
    $region25: #{tpu_custom_call.1} parent=1 // pred_fallthru
      _
    // Predicated region
    $region26: #{tpu_custom_call.1} parent=1 // pred_check
      _
    $region27: #{tpu_custom_call.1} parent=1 // pred_check_branch
      %40 = sbr.rel (0) target = $region29
    $region28: #{tpu_custom_call.1} parent=1 // pred_region
      _
    $region29: #{tpu_custom_call.1} parent=1 // pred_fallthru
      _
    // Predicated region
    $region30: #{tpu_custom_call.1} parent=1 // pred_check
      _
    $region31: #{tpu_custom_call.1} parent=1 // pred_check_branch
      %42 = sbr.rel (0) target = $region33
    $region32: #{tpu_custom_call.1} parent=1 // pred_region
      _
    $region33: #{tpu_custom_call.1} parent=1 // pred_fallthru
      _
    // Predicated region
    $region34: #{tpu_custom_call.1} parent=1 // pred_check
      _
    $region35: #{tpu_custom_call.1} parent=1 // pred_check_branch
      %44 = sbr.rel (0) target = $region37
    $region36: #{tpu_custom_call.1} parent=1 // pred_region
      %45 = dma.done [#allocation3], 128
    $region37: #{tpu_custom_call.1} parent=1 // pred_fallthru
      _
    %v46 = vld [vmem:[%s0] sm:$0xff]
    %v47 = vld [vmem:[%s0 + $0x8] sm:$0xff]
    %v48 = vld [vmem:[%s0 + $0x10] sm:$0xff]
    %v49 = vld [vmem:[%s0 + $0x18] sm:$0xff]
    %v50 = vld [vmem:[%s0 + $0x20] sm:$0xff]
    %v51 = vld [vmem:[%s0 + $0x28] sm:$0xff]
    %v52 = vld [vmem:[%s0 + $0x30] sm:$0xff]
    %v53 = vld [vmem:[%s0 + $0x38] sm:$0xff]
    %v54 = vld [vmem:[%s3] sm:$0xf]
    %v55 = vld [vmem:[%s5] sm:$0x1]
    %v57 = vlaneseq
    %v58 = vshrl.u32 %v57, 7
    %v59 = vsub.s32 0, %v58
    %v60 = vrot.slane %v55, %v59
    %vm62 = vcmask 31744
    %v64 = vsel %vm62, %v46, 0
    %v67 = vsel %vm62, %v47, 0
    %v70 = vsel %vm62, %v48, 0
    %v73 = vsel %vm62, %v49, 0
    %v76 = vsel %vm62, %v50, 0
    %v79 = vsel %vm62, %v51, 0
    %v82 = vsel %vm62, %v52, 0
    %v85 = vsel %vm62, %v53, 0
    %vm87 = vcmask 1043456
    %v89 = vsel %vm87, %v54, 0
    %91 = vmatprep.subr.mxu0 0.0
    %92 = vmatpush1.msra.mxu0 %v89
    %93 = vmatprep.subr.mxu0 0.0
    %94 = vmatpush1.msra.mxu0 0.0
    %95 = vmatprep.subr.mxu0 0.0
    %96 = vmatpush1.msra.mxu0 0.0
    %97 = vmatprep.subr.mxu0 0.0
    %98 = vmatpush1.msra.mxu0 0.0
    %99 = vmatprep.subr.mxu0 0.0
    %100 = vmatpush1.msra.mxu0 0.0
    %101 = vmatprep.subr.mxu0 0.0
    %102 = vmatpush1.msra.mxu0 0.0
    %103 = vmatprep.subr.mxu0 0.0
    %104 = vmatpush1.msra.mxu0 0.0
    %105 = vmatprep.subr.mxu0 0.0
    %106 = vmatpush1.msra.mxu0 0.0
    %107 = vmatprep.subr.mxu0 0.0
    %108 = vmatpush1.msra.mxu0 0.0
    %109 = vmatprep.subr.mxu0 0.0
    %110 = vmatpush1.msra.mxu0 0.0
    %111 = vmatprep.subr.mxu0 0.0
    %112 = vmatpush1.msra.mxu0 0.0
    %113 = vmatprep.subr.mxu0 0.0
    %114 = vmatpush1.msra.mxu0 0.0
    %115 = vmatprep.subr.mxu0 0.0
    %116 = vmatpush1.msra.mxu0 0.0
    %117 = vmatprep.subr.mxu0 0.0
    %118 = vmatpush1.msra.mxu0 0.0
    %119 = vmatprep.subr.mxu0 0.0
    %120 = vmatpush1.msra.mxu0 0.0
    %121 = vmatprep.subr.mxu0 0.0
    %122 = vmatpush1.msra.mxu0 0.0
    %123 = vmatprep.subr.mxu0 0.0
    %124 = vmatpush1.msra.mxu0 0.0
    %125 = vmatprep.subr.mxu0 0.0
    %126 = vmatpush1.msra.mxu0 0.0
    %127 = vmatprep.subr.mxu0 0.0
    %128 = vmatpush1.msra.mxu0 0.0
    %129 = vmatprep.subr.mxu0 0.0
    %130 = vmatpush1.msra.mxu0 0.0
    %131 = vmatprep.subr.mxu0 0.0
    %132 = vmatpush1.msra.mxu0 0.0
    %133 = vmatprep.subr.mxu0 0.0
    %134 = vmatpush1.msra.mxu0 0.0
    %135 = vmatprep.subr.mxu0 0.0
    %136 = vmatpush1.msra.mxu0 0.0
    %137 = vmatprep.subr.mxu0 0.0
    %138 = vmatpush1.msra.mxu0 0.0
    %139 = vmatprep.subr.mxu0 0.0
    %140 = vmatpush1.msra.mxu0 0.0
    %141 = vmatprep.subr.mxu0 0.0
    %142 = vmatpush1.msra.mxu0 0.0
    %143 = vmatprep.subr.mxu0 0.0
    %144 = vmatpush1.msra.mxu0 0.0
    %145 = vmatprep.subr.mxu0 0.0
    %146 = vmatpush1.msra.mxu0 0.0
    %147 = vmatprep.subr.mxu0 0.0
    %148 = vmatpush1.msra.mxu0 0.0
    %149 = vmatprep.subr.mxu0 0.0
    %150 = vmatpush1.msra.mxu0 0.0
    %151 = vmatprep.subr.mxu0 0.0
    %152 = vmatpush1.msra.mxu0 0.0
    %153 = vmatprep.subr.mxu0 0.0
    %154 = vmatpush1.msra.mxu0 0.0
    %155 = vmatprep.mubr.f32.mxu0 0.0
    %156 = vmatmul.mubr.f32.gmra.mrb[0].mxu0 %v64
    %v157 = vpop.f32.mrb[0].mxu0
    %v158 = vadd.f32 %v60, %v157
    %v159 = vpop.f32.mrb[0].mxu0
    %160 = vmatprep.mubr.f32.mxu0 0.0
    %161 = vmatmul.mubr.f32.gmra.mrb[0].mxu0 %v67
    %v162 = vpop.f32.mrb[0].mxu0
    %v163 = vadd.f32 %v60, %v162
    %v164 = vpop.f32.mrb[0].mxu0
    %165 = vmatprep.mubr.f32.mxu0 0.0
    %166 = vmatmul.mubr.f32.gmra.mrb[0].mxu0 %v70
    %v167 = vpop.f32.mrb[0].mxu0
    %v168 = vadd.f32 %v60, %v167
    %v169 = vpop.f32.mrb[0].mxu0
    %170 = vmatprep.mubr.f32.mxu0 0.0
    %171 = vmatmul.mubr.f32.gmra.mrb[0].mxu0 %v73
    %v172 = vpop.f32.mrb[0].mxu0
    %v173 = vadd.f32 %v60, %v172
    %v174 = vpop.f32.mrb[0].mxu0
    %175 = vmatprep.mubr.f32.mxu0 0.0
    %176 = vmatmul.mubr.f32.gmra.mrb[0].mxu0 %v76
    %v177 = vpop.f32.mrb[0].mxu0
    %v178 = vadd.f32 %v60, %v177
    %v179 = vpop.f32.mrb[0].mxu0
    %180 = vmatprep.mubr.f32.mxu0 0.0
    %181 = vmatmul.mubr.f32.gmra.mrb[0].mxu0 %v79
    %v182 = vpop.f32.mrb[0].mxu0
    %v183 = vadd.f32 %v60, %v182
    %v184 = vpop.f32.mrb[0].mxu0
    %185 = vmatprep.mubr.f32.mxu0 0.0
    %186 = vmatmul.mubr.f32.gmra.mrb[0].mxu0 %v82
    %v187 = vpop.f32.mrb[0].mxu0
    %v188 = vadd.f32 %v60, %v187
    %v189 = vpop.f32.mrb[0].mxu0
    %190 = vmatprep.mubr.f32.mxu0 0.0
    %191 = vmatmul.mubr.f32.gmra.mrb[0].mxu0 %v85
    %v192 = vpop.f32.mrb[0].mxu0
    %v193 = vadd.f32 %v60, %v192
    %v194 = vpop.f32.mrb[0].mxu0
    %195 = vdwg.mxu0
    %v196 = vld [vmem:[%s4] sm:$0xff]
    %v197 = vld [vmem:[%s4 + $0x8] sm:$0xff]
    %v198 = vld [vmem:[%s4 + $0x10] sm:$0xff]
    %v199 = vld [vmem:[%s4 + $0x18] sm:$0xff]
    %v200 = vld [vmem:[#allocation2] sm:$0xff]
    %v201 = vld [vmem:[%s2] sm:$0xff]
    %v202 = vlaneseq
    %v203 = vand.u32 %v202, 127
    %vm204 = vcmp.ge.s32.totalorder %v203, 64
    %vm205 = vcmp.lt.s32.totalorder %v203, 96
    %vm206 = vmand %vm204, %vm205
    %vm207 = vcmask 261120
    %v209 = vsel %vm207, %v200, 0
    %211 = vmatprep.subr.mxu0 0.0
    %212 = vmatpush1.msra.mxu0 %v196
    %213 = vmatprep.subr.mxu0 0.0
    %214 = vmatpush1.msra.mxu0 %v197
    %215 = vmatprep.subr.mxu0 0.0
    %216 = vmatpush1.msra.mxu0 %v198
    %217 = vmatprep.subr.mxu0 0.0
    %218 = vmatpush1.msra.mxu0 %v199
    %219 = vmatprep.subr.mxu0 0.0
    %220 = vmatpush1.msra.mxu0 0.0
    %221 = vmatprep.subr.mxu0 0.0
    %222 = vmatpush1.msra.mxu0 0.0
    %223 = vmatprep.subr.mxu0 0.0
    %224 = vmatpush1.msra.mxu0 0.0
    %225 = vmatprep.subr.mxu0 0.0
    %226 = vmatpush1.msra.mxu0 0.0
    %227 = vmatprep.subr.mxu0 0.0
    %228 = vmatpush1.msra.mxu0 0.0
    %229 = vmatprep.subr.mxu0 0.0
    %230 = vmatpush1.msra.mxu0 0.0
    %231 = vmatprep.subr.mxu0 0.0
    %232 = vmatpush1.msra.mxu0 0.0
    %233 = vmatprep.subr.mxu0 0.0
    %234 = vmatpush1.msra.mxu0 0.0
    %235 = vmatprep.subr.mxu0 0.0
    %236 = vmatpush1.msra.mxu0 0.0
    %237 = vmatprep.subr.mxu0 0.0
    %238 = vmatpush1.msra.mxu0 0.0
    %239 = vmatprep.subr.mxu0 0.0
    %240 = vmatpush1.msra.mxu0 0.0
    %241 = vmatprep.subr.mxu0 0.0
    %242 = vmatpush1.msra.mxu0 0.0
    %243 = vmatprep.subr.mxu0 0.0
    %244 = vmatpush1.msra.mxu0 0.0
    %245 = vmatprep.subr.mxu0 0.0
    %246 = vmatpush1.msra.mxu0 0.0
    %247 = vmatprep.subr.mxu0 0.0
    %248 = vmatpush1.msra.mxu0 0.0
    %249 = vmatprep.subr.mxu0 0.0
    %250 = vmatpush1.msra.mxu0 0.0
    %251 = vmatprep.subr.mxu0 0.0
    %252 = vmatpush1.msra.mxu0 0.0
    %253 = vmatprep.subr.mxu0 0.0
    %254 = vmatpush1.msra.mxu0 0.0
    %255 = vmatprep.subr.mxu0 0.0
    %256 = vmatpush1.msra.mxu0 0.0
    %257 = vmatprep.subr.mxu0 0.0
    %258 = vmatpush1.msra.mxu0 0.0
    %259 = vmatprep.subr.mxu0 0.0
    %260 = vmatpush1.msra.mxu0 0.0
    %261 = vmatprep.subr.mxu0 0.0
    %262 = vmatpush1.msra.mxu0 0.0
    %263 = vmatprep.subr.mxu0 0.0
    %264 = vmatpush1.msra.mxu0 0.0
    %265 = vmatprep.subr.mxu0 0.0
    %266 = vmatpush1.msra.mxu0 0.0
    %267 = vmatprep.subr.mxu0 0.0
    %268 = vmatpush1.msra.mxu0 0.0
    %269 = vmatprep.subr.mxu0 0.0
    %270 = vmatpush1.msra.mxu0 0.0
    %271 = vmatprep.subr.mxu0 0.0
    %272 = vmatpush1.msra.mxu0 0.0
    %273 = vmatprep.subr.mxu0 0.0
    %274 = vmatpush1.msra.mxu0 0.0
    %275 = vmatprep.mubr.f32.mxu0 0.0
    %276 = vmatmul.mubr.f32.gmra.mrb[0].mxu0 %v209
    %v277 = vpop.f32.mrb[0].mxu0
    %v278 = vadd.f32 0.0, %v277
    %v279 = vpop.f32.mrb[0].mxu0
    %280 = vdwg.mxu0
    %v281 = vadd.f32 %v158, %v278
    %v282 = vxor.u32 %v281, 2147483648
    %v283 = vmul.f32 %v282, 1.442695
    %v284 = vpow.pop %v283
    %v285 = vadd.f32 %v284, 1.0
    %v286 = vrcp.pop %v285
    %v287 = vmul.f32 1.0, %v286
    %v288 = vtanh.pop %v281
    %v289 = vsel %vm206, %v288, %v287
    %291 = vrot.lane.b32.xlu0 %v201, 32
    %v292 = vpop.permute.xlu0 %291
    %v294 = vmul.f32 %v289, %v292
    %296 = vrot.lane.b32.xlu0 %v289, 64
    %v297 = vpop.permute.xlu0 %296
    %v299 = vmul.f32 %v289, %v297
    %301 = vrot.lane.b32.xlu0 %v299, 32
    %v302 = vpop.permute.xlu0 %301
    %v304 = vadd.f32 %v294, %v302
    %v305 = vtanh.pop %v304
    %307 = vrot.lane.b32.xlu0 %v305, 64
    %v308 = vpop.permute.xlu0 %307
    %v310 = vmul.f32 %v289, %v308
    %312 = vrot.lane.b32.xlu0 %v310, 32
    %v313 = vpop.permute.xlu0 %312
    %v314 = vsel %vm207, %v313, 0
    %316 = vmatprep.subr.mxu0 0.0
    %317 = vmatpush1.msra.mxu0 %v196
    %318 = vmatprep.subr.mxu0 0.0
    %319 = vmatpush1.msra.mxu0 %v197
    %320 = vmatprep.subr.mxu0 0.0
    %321 = vmatpush1.msra.mxu0 %v198
    %322 = vmatprep.subr.mxu0 0.0
    %323 = vmatpush1.msra.mxu0 %v199
    %324 = vmatprep.subr.mxu0 0.0
    %325 = vmatpush1.msra.mxu0 0.0
    %326 = vmatprep.subr.mxu0 0.0
    %327 = vmatpush1.msra.mxu0 0.0
    %328 = vmatprep.subr.mxu0 0.0
    %329 = vmatpush1.msra.mxu0 0.0
    %330 = vmatprep.subr.mxu0 0.0
    %331 = vmatpush1.msra.mxu0 0.0
    %332 = vmatprep.subr.mxu0 0.0
    %333 = vmatpush1.msra.mxu0 0.0
    %334 = vmatprep.subr.mxu0 0.0
    %335 = vmatpush1.msra.mxu0 0.0
    %336 = vmatprep.subr.mxu0 0.0
    %337 = vmatpush1.msra.mxu0 0.0
    %338 = vmatprep.subr.mxu0 0.0
    %339 = vmatpush1.msra.mxu0 0.0
    %340 = vmatprep.subr.mxu0 0.0
    %341 = vmatpush1.msra.mxu0 0.0
    %342 = vmatprep.subr.mxu0 0.0
    %343 = vmatpush1.msra.mxu0 0.0
    %344 = vmatprep.subr.mxu0 0.0
    %345 = vmatpush1.msra.mxu0 0.0
    %346 = vmatprep.subr.mxu0 0.0
    %347 = vmatpush1.msra.mxu0 0.0
    %348 = vmatprep.subr.mxu0 0.0
    %349 = vmatpush1.msra.mxu0 0.0
    %350 = vmatprep.subr.mxu0 0.0
    %351 = vmatpush1.msra.mxu0 0.0
    %352 = vmatprep.subr.mxu0 0.0
    %353 = vmatpush1.msra.mxu0 0.0
    %354 = vmatprep.subr.mxu0 0.0
    %355 = vmatpush1.msra.mxu0 0.0
    %356 = vmatprep.subr.mxu0 0.0
    %357 = vmatpush1.msra.mxu0 0.0
    %358 = vmatprep.subr.mxu0 0.0
    %359 = vmatpush1.msra.mxu0 0.0
    %360 = vmatprep.subr.mxu0 0.0
    %361 = vmatpush1.msra.mxu0 0.0
    %362 = vmatprep.subr.mxu0 0.0
    %363 = vmatpush1.msra.mxu0 0.0
    %364 = vmatprep.subr.mxu0 0.0
    %365 = vmatpush1.msra.mxu0 0.0
    %366 = vmatprep.subr.mxu0 0.0
    %367 = vmatpush1.msra.mxu0 0.0
    %368 = vmatprep.subr.mxu0 0.0
    %369 = vmatpush1.msra.mxu0 0.0
    %370 = vmatprep.subr.mxu0 0.0
    %371 = vmatpush1.msra.mxu0 0.0
    %372 = vmatprep.subr.mxu0 0.0
    %373 = vmatpush1.msra.mxu0 0.0
    %374 = vmatprep.subr.mxu0 0.0
    %375 = vmatpush1.msra.mxu0 0.0
    %376 = vmatprep.subr.mxu0 0.0
    %377 = vmatpush1.msra.mxu0 0.0
    %378 = vmatprep.subr.mxu0 0.0
    %379 = vmatpush1.msra.mxu0 0.0
    %380 = vmatprep.mubr.f32.mxu0 0.0
    %381 = vmatmul.mubr.f32.gmra.mrb[0].mxu0 %v314
    %v382 = vpop.f32.mrb[0].mxu0
    %v383 = vadd.f32 0.0, %v382
    %v384 = vpop.f32.mrb[0].mxu0
    %385 = vdwg.mxu0
    %v386 = vadd.f32 %v163, %v383
    %v387 = vxor.u32 %v386, 2147483648
    %v388 = vmul.f32 %v387, 1.442695
    %v389 = vpow.pop %v388
    %v390 = vadd.f32 %v389, 1.0
    %v391 = vrcp.pop %v390
    %v392 = vmul.f32 1.0, %v391
    %v393 = vtanh.pop %v386
    %v394 = vsel %vm206, %v393, %v392
    %v395 = vmul.f32 %v394, %v304
    %397 = vrot.lane.b32.xlu0 %v394, 64
    %v398 = vpop.permute.xlu0 %397
    %v400 = vmul.f32 %v394, %v398
    %402 = vrot.lane.b32.xlu0 %v400, 32
    %v403 = vpop.permute.xlu0 %402
    %v405 = vadd.f32 %v395, %v403
    %v406 = vtanh.pop %v405
    %408 = vrot.lane.b32.xlu0 %v406, 64
    %v409 = vpop.permute.xlu0 %408
    %v411 = vmul.f32 %v394, %v409
    %413 = vrot.lane.b32.xlu0 %v411, 32
    %v414 = vpop.permute.xlu0 %413
    %v415 = vsel %vm207, %v414, 0
    %417 = vmatprep.subr.mxu0 0.0
    %418 = vmatpush1.msra.mxu0 %v196
    %419 = vmatprep.subr.mxu0 0.0
    %420 = vmatpush1.msra.mxu0 %v197
    %421 = vmatprep.subr.mxu0 0.0
    %422 = vmatpush1.msra.mxu0 %v198
    %423 = vmatprep.subr.mxu0 0.0
    %424 = vmatpush1.msra.mxu0 %v199
    %425 = vmatprep.subr.mxu0 0.0
    %426 = vmatpush1.msra.mxu0 0.0
    %427 = vmatprep.subr.mxu0 0.0
    %428 = vmatpush1.msra.mxu0 0.0
    %429 = vmatprep.subr.mxu0 0.0
    %430 = vmatpush1.msra.mxu0 0.0
    %431 = vmatprep.subr.mxu0 0.0
    %432 = vmatpush1.msra.mxu0 0.0
    %433 = vmatprep.subr.mxu0 0.0
    %434 = vmatpush1.msra.mxu0 0.0
    %435 = vmatprep.subr.mxu0 0.0
    %436 = vmatpush1.msra.mxu0 0.0
    %437 = vmatprep.subr.mxu0 0.0
    %438 = vmatpush1.msra.mxu0 0.0
    %439 = vmatprep.subr.mxu0 0.0
    %440 = vmatpush1.msra.mxu0 0.0
    %441 = vmatprep.subr.mxu0 0.0
    %442 = vmatpush1.msra.mxu0 0.0
    %443 = vmatprep.subr.mxu0 0.0
    %444 = vmatpush1.msra.mxu0 0.0
    %445 = vmatprep.subr.mxu0 0.0
    %446 = vmatpush1.msra.mxu0 0.0
    %447 = vmatprep.subr.mxu0 0.0
    %448 = vmatpush1.msra.mxu0 0.0
    %449 = vmatprep.subr.mxu0 0.0
    %450 = vmatpush1.msra.mxu0 0.0
    %451 = vmatprep.subr.mxu0 0.0
    %452 = vmatpush1.msra.mxu0 0.0
    %453 = vmatprep.subr.mxu0 0.0
    %454 = vmatpush1.msra.mxu0 0.0
    %455 = vmatprep.subr.mxu0 0.0
    %456 = vmatpush1.msra.mxu0 0.0
    %457 = vmatprep.subr.mxu0 0.0
    %458 = vmatpush1.msra.mxu0 0.0
    %459 = vmatprep.subr.mxu0 0.0
    %460 = vmatpush1.msra.mxu0 0.0
    %461 = vmatprep.subr.mxu0 0.0
    %462 = vmatpush1.msra.mxu0 0.0
    %463 = vmatprep.subr.mxu0 0.0
    %464 = vmatpush1.msra.mxu0 0.0
    %465 = vmatprep.subr.mxu0 0.0
    %466 = vmatpush1.msra.mxu0 0.0
    %467 = vmatprep.subr.mxu0 0.0
    %468 = vmatpush1.msra.mxu0 0.0
    %469 = vmatprep.subr.mxu0 0.0
    %470 = vmatpush1.msra.mxu0 0.0
    %471 = vmatprep.subr.mxu0 0.0
    %472 = vmatpush1.msra.mxu0 0.0
    %473 = vmatprep.subr.mxu0 0.0
    %474 = vmatpush1.msra.mxu0 0.0
    %475 = vmatprep.subr.mxu0 0.0
    %476 = vmatpush1.msra.mxu0 0.0
    %477 = vmatprep.subr.mxu0 0.0
    %478 = vmatpush1.msra.mxu0 0.0
    %479 = vmatprep.subr.mxu0 0.0
    %480 = vmatpush1.msra.mxu0 0.0
    %481 = vmatprep.mubr.f32.mxu0 0.0
    %482 = vmatmul.mubr.f32.gmra.mrb[0].mxu0 %v415
    %v483 = vpop.f32.mrb[0].mxu0
    %v484 = vadd.f32 0.0, %v483
    %v485 = vpop.f32.mrb[0].mxu0
    %486 = vdwg.mxu0
    %v487 = vadd.f32 %v168, %v484
    %v488 = vxor.u32 %v487, 2147483648
    %v489 = vmul.f32 %v488, 1.442695
    %v490 = vpow.pop %v489
    %v491 = vadd.f32 %v490, 1.0
    %v492 = vrcp.pop %v491
    %v493 = vmul.f32 1.0, %v492
    %v494 = vtanh.pop %v487
    %v495 = vsel %vm206, %v494, %v493
    %v496 = vmul.f32 %v495, %v405
    %498 = vrot.lane.b32.xlu0 %v495, 64
    %v499 = vpop.permute.xlu0 %498
    %v501 = vmul.f32 %v495, %v499
    %503 = vrot.lane.b32.xlu0 %v501, 32
    %v504 = vpop.permute.xlu0 %503
    %v506 = vadd.f32 %v496, %v504
    %v507 = vtanh.pop %v506
    %509 = vrot.lane.b32.xlu0 %v507, 64
    %v510 = vpop.permute.xlu0 %509
    %v512 = vmul.f32 %v495, %v510
    %514 = vrot.lane.b32.xlu0 %v512, 32
    %v515 = vpop.permute.xlu0 %514
    %v516 = vsel %vm207, %v515, 0
    %518 = vmatprep.subr.mxu0 0.0
    %519 = vmatpush1.msra.mxu0 %v196
    %520 = vmatprep.subr.mxu0 0.0
    %521 = vmatpush1.msra.mxu0 %v197
    %522 = vmatprep.subr.mxu0 0.0
    %523 = vmatpush1.msra.mxu0 %v198
    %524 = vmatprep.subr.mxu0 0.0
    %525 = vmatpush1.msra.mxu0 %v199
    %526 = vmatprep.subr.mxu0 0.0
    %527 = vmatpush1.msra.mxu0 0.0
    %528 = vmatprep.subr.mxu0 0.0
    %529 = vmatpush1.msra.mxu0 0.0
    %530 = vmatprep.subr.mxu0 0.0
    %531 = vmatpush1.msra.mxu0 0.0
    %532 = vmatprep.subr.mxu0 0.0
    %533 = vmatpush1.msra.mxu0 0.0
    %534 = vmatprep.subr.mxu0 0.0
    %535 = vmatpush1.msra.mxu0 0.0
    %536 = vmatprep.subr.mxu0 0.0
    %537 = vmatpush1.msra.mxu0 0.0
    %538 = vmatprep.subr.mxu0 0.0
    %539 = vmatpush1.msra.mxu0 0.0
    %540 = vmatprep.subr.mxu0 0.0
    %541 = vmatpush1.msra.mxu0 0.0
    %542 = vmatprep.subr.mxu0 0.0
    %543 = vmatpush1.msra.mxu0 0.0
    %544 = vmatprep.subr.mxu0 0.0
    %545 = vmatpush1.msra.mxu0 0.0
    %546 = vmatprep.subr.mxu0 0.0
    %547 = vmatpush1.msra.mxu0 0.0
    %548 = vmatprep.subr.mxu0 0.0
    %549 = vmatpush1.msra.mxu0 0.0
    %550 = vmatprep.subr.mxu0 0.0
    %551 = vmatpush1.msra.mxu0 0.0
    %552 = vmatprep.subr.mxu0 0.0
    %553 = vmatpush1.msra.mxu0 0.0
    %554 = vmatprep.subr.mxu0 0.0
    %555 = vmatpush1.msra.mxu0 0.0
    %556 = vmatprep.subr.mxu0 0.0
    %557 = vmatpush1.msra.mxu0 0.0
    %558 = vmatprep.subr.mxu0 0.0
    %559 = vmatpush1.msra.mxu0 0.0
    %560 = vmatprep.subr.mxu0 0.0
    %561 = vmatpush1.msra.mxu0 0.0
    %562 = vmatprep.subr.mxu0 0.0
    %563 = vmatpush1.msra.mxu0 0.0
    %564 = vmatprep.subr.mxu0 0.0
    %565 = vmatpush1.msra.mxu0 0.0
    %566 = vmatprep.subr.mxu0 0.0
    %567 = vmatpush1.msra.mxu0 0.0
    %568 = vmatprep.subr.mxu0 0.0
    %569 = vmatpush1.msra.mxu0 0.0
    %570 = vmatprep.subr.mxu0 0.0
    %571 = vmatpush1.msra.mxu0 0.0
    %572 = vmatprep.subr.mxu0 0.0
    %573 = vmatpush1.msra.mxu0 0.0
    %574 = vmatprep.subr.mxu0 0.0
    %575 = vmatpush1.msra.mxu0 0.0
    %576 = vmatprep.subr.mxu0 0.0
    %577 = vmatpush1.msra.mxu0 0.0
    %578 = vmatprep.subr.mxu0 0.0
    %579 = vmatpush1.msra.mxu0 0.0
    %580 = vmatprep.subr.mxu0 0.0
    %581 = vmatpush1.msra.mxu0 0.0
    %582 = vmatprep.mubr.f32.mxu0 0.0
    %583 = vmatmul.mubr.f32.gmra.mrb[0].mxu0 %v516
    %v584 = vpop.f32.mrb[0].mxu0
    %v585 = vadd.f32 0.0, %v584
    %v586 = vpop.f32.mrb[0].mxu0
    %587 = vdwg.mxu0
    %v588 = vadd.f32 %v173, %v585
    %v589 = vxor.u32 %v588, 2147483648
    %v590 = vmul.f32 %v589, 1.442695
    %v591 = vpow.pop %v590
    %v592 = vadd.f32 %v591, 1.0
    %v593 = vrcp.pop %v592
    %v594 = vmul.f32 1.0, %v593
    %v595 = vtanh.pop %v588
    %v596 = vsel %vm206, %v595, %v594
    %v597 = vmul.f32 %v596, %v506
    %599 = vrot.lane.b32.xlu0 %v596, 64
    %v600 = vpop.permute.xlu0 %599
    %v602 = vmul.f32 %v596, %v600
    %604 = vrot.lane.b32.xlu0 %v602, 32
    %v605 = vpop.permute.xlu0 %604
    %v607 = vadd.f32 %v597, %v605
    %v608 = vtanh.pop %v607
    %610 = vrot.lane.b32.xlu0 %v608, 64
    %v611 = vpop.permute.xlu0 %610
    %v613 = vmul.f32 %v596, %v611
    %615 = vrot.lane.b32.xlu0 %v613, 32
    %v616 = vpop.permute.xlu0 %615
    %v617 = vsel %vm207, %v616, 0
    %619 = vmatprep.subr.mxu0 0.0
    %620 = vmatpush1.msra.mxu0 %v196
    %621 = vmatprep.subr.mxu0 0.0
    %622 = vmatpush1.msra.mxu0 %v197
    %623 = vmatprep.subr.mxu0 0.0
    %624 = vmatpush1.msra.mxu0 %v198
    %625 = vmatprep.subr.mxu0 0.0
    %626 = vmatpush1.msra.mxu0 %v199
    %627 = vmatprep.subr.mxu0 0.0
    %628 = vmatpush1.msra.mxu0 0.0
    %629 = vmatprep.subr.mxu0 0.0
    %630 = vmatpush1.msra.mxu0 0.0
    %631 = vmatprep.subr.mxu0 0.0
    %632 = vmatpush1.msra.mxu0 0.0
    %633 = vmatprep.subr.mxu0 0.0
    %634 = vmatpush1.msra.mxu0 0.0
    %635 = vmatprep.subr.mxu0 0.0
    %636 = vmatpush1.msra.mxu0 0.0
    %637 = vmatprep.subr.mxu0 0.0
    %638 = vmatpush1.msra.mxu0 0.0
    %639 = vmatprep.subr.mxu0 0.0
    %640 = vmatpush1.msra.mxu0 0.0
    %641 = vmatprep.subr.mxu0 0.0
    %642 = vmatpush1.msra.mxu0 0.0
    %643 = vmatprep.subr.mxu0 0.0
    %644 = vmatpush1.msra.mxu0 0.0
    %645 = vmatprep.subr.mxu0 0.0
    %646 = vmatpush1.msra.mxu0 0.0
    %647 = vmatprep.subr.mxu0 0.0
    %648 = vmatpush1.msra.mxu0 0.0
    %649 = vmatprep.subr.mxu0 0.0
    %650 = vmatpush1.msra.mxu0 0.0
    %651 = vmatprep.subr.mxu0 0.0
    %652 = vmatpush1.msra.mxu0 0.0
    %653 = vmatprep.subr.mxu0 0.0
    %654 = vmatpush1.msra.mxu0 0.0
    %655 = vmatprep.subr.mxu0 0.0
    %656 = vmatpush1.msra.mxu0 0.0
    %657 = vmatprep.subr.mxu0 0.0
    %658 = vmatpush1.msra.mxu0 0.0
    %659 = vmatprep.subr.mxu0 0.0
    %660 = vmatpush1.msra.mxu0 0.0
    %661 = vmatprep.subr.mxu0 0.0
    %662 = vmatpush1.msra.mxu0 0.0
    %663 = vmatprep.subr.mxu0 0.0
    %664 = vmatpush1.msra.mxu0 0.0
    %665 = vmatprep.subr.mxu0 0.0
    %666 = vmatpush1.msra.mxu0 0.0
    %667 = vmatprep.subr.mxu0 0.0
    %668 = vmatpush1.msra.mxu0 0.0
    %669 = vmatprep.subr.mxu0 0.0
    %670 = vmatpush1.msra.mxu0 0.0
    %671 = vmatprep.subr.mxu0 0.0
    %672 = vmatpush1.msra.mxu0 0.0
    %673 = vmatprep.subr.mxu0 0.0
    %674 = vmatpush1.msra.mxu0 0.0
    %675 = vmatprep.subr.mxu0 0.0
    %676 = vmatpush1.msra.mxu0 0.0
    %677 = vmatprep.subr.mxu0 0.0
    %678 = vmatpush1.msra.mxu0 0.0
    %679 = vmatprep.subr.mxu0 0.0
    %680 = vmatpush1.msra.mxu0 0.0
    %681 = vmatprep.subr.mxu0 0.0
    %682 = vmatpush1.msra.mxu0 0.0
    %683 = vmatprep.mubr.f32.mxu0 0.0
    %684 = vmatmul.mubr.f32.gmra.mrb[0].mxu0 %v617
    %v685 = vpop.f32.mrb[0].mxu0
    %v686 = vadd.f32 0.0, %v685
    %v687 = vpop.f32.mrb[0].mxu0
    %688 = vdwg.mxu0
    %v689 = vadd.f32 %v178, %v686
    %v690 = vxor.u32 %v689, 2147483648
    %v691 = vmul.f32 %v690, 1.442695
    %v692 = vpow.pop %v691
    %v693 = vadd.f32 %v692, 1.0
    %v694 = vrcp.pop %v693
    %v695 = vmul.f32 1.0, %v694
    %v696 = vtanh.pop %v689
    %v697 = vsel %vm206, %v696, %v695
    %v698 = vmul.f32 %v697, %v607
    %700 = vrot.lane.b32.xlu0 %v697, 64
    %v701 = vpop.permute.xlu0 %700
    %v703 = vmul.f32 %v697, %v701
    %705 = vrot.lane.b32.xlu0 %v703, 32
    %v706 = vpop.permute.xlu0 %705
    %v708 = vadd.f32 %v698, %v706
    %v709 = vtanh.pop %v708
    %711 = vrot.lane.b32.xlu0 %v709, 64
    %v712 = vpop.permute.xlu0 %711
    %v714 = vmul.f32 %v697, %v712
    %716 = vrot.lane.b32.xlu0 %v714, 32
    %v717 = vpop.permute.xlu0 %716
    %v718 = vsel %vm207, %v717, 0
    %720 = vmatprep.subr.mxu0 0.0
    %721 = vmatpush1.msra.mxu0 %v196
    %722 = vmatprep.subr.mxu0 0.0
    %723 = vmatpush1.msra.mxu0 %v197
    %724 = vmatprep.subr.mxu0 0.0
    %725 = vmatpush1.msra.mxu0 %v198
    %726 = vmatprep.subr.mxu0 0.0
    %727 = vmatpush1.msra.mxu0 %v199
    %728 = vmatprep.subr.mxu0 0.0
    %729 = vmatpush1.msra.mxu0 0.0
    %730 = vmatprep.subr.mxu0 0.0
    %731 = vmatpush1.msra.mxu0 0.0
    %732 = vmatprep.subr.mxu0 0.0
    %733 = vmatpush1.msra.mxu0 0.0
    %734 = vmatprep.subr.mxu0 0.0
    %735 = vmatpush1.msra.mxu0 0.0
    %736 = vmatprep.subr.mxu0 0.0
    %737 = vmatpush1.msra.mxu0 0.0
    %738 = vmatprep.subr.mxu0 0.0
    %739 = vmatpush1.msra.mxu0 0.0
    %740 = vmatprep.subr.mxu0 0.0
    %741 = vmatpush1.msra.mxu0 0.0
    %742 = vmatprep.subr.mxu0 0.0
    %743 = vmatpush1.msra.mxu0 0.0
    %744 = vmatprep.subr.mxu0 0.0
    %745 = vmatpush1.msra.mxu0 0.0
    %746 = vmatprep.subr.mxu0 0.0
    %747 = vmatpush1.msra.mxu0 0.0
    %748 = vmatprep.subr.mxu0 0.0
    %749 = vmatpush1.msra.mxu0 0.0
    %750 = vmatprep.subr.mxu0 0.0
    %751 = vmatpush1.msra.mxu0 0.0
    %752 = vmatprep.subr.mxu0 0.0
    %753 = vmatpush1.msra.mxu0 0.0
    %754 = vmatprep.subr.mxu0 0.0
    %755 = vmatpush1.msra.mxu0 0.0
    %756 = vmatprep.subr.mxu0 0.0
    %757 = vmatpush1.msra.mxu0 0.0
    %758 = vmatprep.subr.mxu0 0.0
    %759 = vmatpush1.msra.mxu0 0.0
    %760 = vmatprep.subr.mxu0 0.0
    %761 = vmatpush1.msra.mxu0 0.0
    %762 = vmatprep.subr.mxu0 0.0
    %763 = vmatpush1.msra.mxu0 0.0
    %764 = vmatprep.subr.mxu0 0.0
    %765 = vmatpush1.msra.mxu0 0.0
    %766 = vmatprep.subr.mxu0 0.0
    %767 = vmatpush1.msra.mxu0 0.0
    %768 = vmatprep.subr.mxu0 0.0
    %769 = vmatpush1.msra.mxu0 0.0
    %770 = vmatprep.subr.mxu0 0.0
    %771 = vmatpush1.msra.mxu0 0.0
    %772 = vmatprep.subr.mxu0 0.0
    %773 = vmatpush1.msra.mxu0 0.0
    %774 = vmatprep.subr.mxu0 0.0
    %775 = vmatpush1.msra.mxu0 0.0
    %776 = vmatprep.subr.mxu0 0.0
    %777 = vmatpush1.msra.mxu0 0.0
    %778 = vmatprep.subr.mxu0 0.0
    %779 = vmatpush1.msra.mxu0 0.0
    %780 = vmatprep.subr.mxu0 0.0
    %781 = vmatpush1.msra.mxu0 0.0
    %782 = vmatprep.subr.mxu0 0.0
    %783 = vmatpush1.msra.mxu0 0.0
    %784 = vmatprep.mubr.f32.mxu0 0.0
    %785 = vmatmul.mubr.f32.gmra.mrb[0].mxu0 %v718
    %v786 = vpop.f32.mrb[0].mxu0
    %v787 = vadd.f32 0.0, %v786
    %v788 = vpop.f32.mrb[0].mxu0
    %789 = vdwg.mxu0
    %v790 = vadd.f32 %v183, %v787
    %v791 = vxor.u32 %v790, 2147483648
    %v792 = vmul.f32 %v791, 1.442695
    %v793 = vpow.pop %v792
    %v794 = vadd.f32 %v793, 1.0
    %v795 = vrcp.pop %v794
    %v796 = vmul.f32 1.0, %v795
    %v797 = vtanh.pop %v790
    %v798 = vsel %vm206, %v797, %v796
    %v799 = vmul.f32 %v798, %v708
    %801 = vrot.lane.b32.xlu0 %v798, 64
    %v802 = vpop.permute.xlu0 %801
    %v804 = vmul.f32 %v798, %v802
    %806 = vrot.lane.b32.xlu0 %v804, 32
    %v807 = vpop.permute.xlu0 %806
    %v809 = vadd.f32 %v799, %v807
    %v810 = vtanh.pop %v809
    %812 = vrot.lane.b32.xlu0 %v810, 64
    %v813 = vpop.permute.xlu0 %812
    %v815 = vmul.f32 %v798, %v813
    %817 = vrot.lane.b32.xlu0 %v815, 32
    %v818 = vpop.permute.xlu0 %817
    %v819 = vsel %vm207, %v818, 0
    %821 = vmatprep.subr.mxu0 0.0
    %822 = vmatpush1.msra.mxu0 %v196
    %823 = vmatprep.subr.mxu0 0.0
    %824 = vmatpush1.msra.mxu0 %v197
    %825 = vmatprep.subr.mxu0 0.0
    %826 = vmatpush1.msra.mxu0 %v198
    %827 = vmatprep.subr.mxu0 0.0
    %828 = vmatpush1.msra.mxu0 %v199
    %829 = vmatprep.subr.mxu0 0.0
    %830 = vmatpush1.msra.mxu0 0.0
    %831 = vmatprep.subr.mxu0 0.0
    %832 = vmatpush1.msra.mxu0 0.0
    %833 = vmatprep.subr.mxu0 0.0
    %834 = vmatpush1.msra.mxu0 0.0
    %835 = vmatprep.subr.mxu0 0.0
    %836 = vmatpush1.msra.mxu0 0.0
    %837 = vmatprep.subr.mxu0 0.0
    %838 = vmatpush1.msra.mxu0 0.0
    %839 = vmatprep.subr.mxu0 0.0
    %840 = vmatpush1.msra.mxu0 0.0
    %841 = vmatprep.subr.mxu0 0.0
    %842 = vmatpush1.msra.mxu0 0.0
    %843 = vmatprep.subr.mxu0 0.0
    %844 = vmatpush1.msra.mxu0 0.0
    %845 = vmatprep.subr.mxu0 0.0
    %846 = vmatpush1.msra.mxu0 0.0
    %847 = vmatprep.subr.mxu0 0.0
    %848 = vmatpush1.msra.mxu0 0.0
    %849 = vmatprep.subr.mxu0 0.0
    %850 = vmatpush1.msra.mxu0 0.0
    %851 = vmatprep.subr.mxu0 0.0
    %852 = vmatpush1.msra.mxu0 0.0
    %853 = vmatprep.subr.mxu0 0.0
    %854 = vmatpush1.msra.mxu0 0.0
    %855 = vmatprep.subr.mxu0 0.0
    %856 = vmatpush1.msra.mxu0 0.0
    %857 = vmatprep.subr.mxu0 0.0
    %858 = vmatpush1.msra.mxu0 0.0
    %859 = vmatprep.subr.mxu0 0.0
    %860 = vmatpush1.msra.mxu0 0.0
    %861 = vmatprep.subr.mxu0 0.0
    %862 = vmatpush1.msra.mxu0 0.0
    %863 = vmatprep.subr.mxu0 0.0
    %864 = vmatpush1.msra.mxu0 0.0
    %865 = vmatprep.subr.mxu0 0.0
    %866 = vmatpush1.msra.mxu0 0.0
    %867 = vmatprep.subr.mxu0 0.0
    %868 = vmatpush1.msra.mxu0 0.0
    %869 = vmatprep.subr.mxu0 0.0
    %870 = vmatpush1.msra.mxu0 0.0
    %871 = vmatprep.subr.mxu0 0.0
    %872 = vmatpush1.msra.mxu0 0.0
    %873 = vmatprep.subr.mxu0 0.0
    %874 = vmatpush1.msra.mxu0 0.0
    %875 = vmatprep.subr.mxu0 0.0
    %876 = vmatpush1.msra.mxu0 0.0
    %877 = vmatprep.subr.mxu0 0.0
    %878 = vmatpush1.msra.mxu0 0.0
    %879 = vmatprep.subr.mxu0 0.0
    %880 = vmatpush1.msra.mxu0 0.0
    %881 = vmatprep.subr.mxu0 0.0
    %882 = vmatpush1.msra.mxu0 0.0
    %883 = vmatprep.subr.mxu0 0.0
    %884 = vmatpush1.msra.mxu0 0.0
    %885 = vmatprep.mubr.f32.mxu0 0.0
    %886 = vmatmul.mubr.f32.gmra.mrb[0].mxu0 %v819
    %v887 = vpop.f32.mrb[0].mxu0
    %v888 = vadd.f32 0.0, %v887
    %v889 = vpop.f32.mrb[0].mxu0
    %890 = vdwg.mxu0
    %v891 = vadd.f32 %v188, %v888
    %v892 = vxor.u32 %v891, 2147483648
    %v893 = vmul.f32 %v892, 1.442695
    %v894 = vpow.pop %v893
    %v895 = vadd.f32 %v894, 1.0
    %v896 = vrcp.pop %v895
    %v897 = vmul.f32 1.0, %v896
    %v898 = vtanh.pop %v891
    %v899 = vsel %vm206, %v898, %v897
    %v900 = vmul.f32 %v899, %v809
    %902 = vrot.lane.b32.xlu0 %v899, 64
    %v903 = vpop.permute.xlu0 %902
    %v905 = vmul.f32 %v899, %v903
    %907 = vrot.lane.b32.xlu0 %v905, 32
    %v908 = vpop.permute.xlu0 %907
    %v910 = vadd.f32 %v900, %v908
    %v911 = vtanh.pop %v910
    %913 = vrot.lane.b32.xlu0 %v911, 64
    %v914 = vpop.permute.xlu0 %913
    %v916 = vmul.f32 %v899, %v914
    %918 = vrot.lane.b32.xlu0 %v916, 32
    %v919 = vpop.permute.xlu0 %918
    %v920 = vsel %vm207, %v919, 0
    %922 = vmatprep.subr.mxu0 0.0
    %923 = vmatpush1.msra.mxu0 %v196
    %924 = vmatprep.subr.mxu0 0.0
    %925 = vmatpush1.msra.mxu0 %v197
    %926 = vmatprep.subr.mxu0 0.0
    %927 = vmatpush1.msra.mxu0 %v198
    %928 = vmatprep.subr.mxu0 0.0
    %929 = vmatpush1.msra.mxu0 %v199
    %930 = vmatprep.subr.mxu0 0.0
    %931 = vmatpush1.msra.mxu0 0.0
    %932 = vmatprep.subr.mxu0 0.0
    %933 = vmatpush1.msra.mxu0 0.0
    %934 = vmatprep.subr.mxu0 0.0
    %935 = vmatpush1.msra.mxu0 0.0
    %936 = vmatprep.subr.mxu0 0.0
    %937 = vmatpush1.msra.mxu0 0.0
    %938 = vmatprep.subr.mxu0 0.0
    %939 = vmatpush1.msra.mxu0 0.0
    %940 = vmatprep.subr.mxu0 0.0
    %941 = vmatpush1.msra.mxu0 0.0
    %942 = vmatprep.subr.mxu0 0.0
    %943 = vmatpush1.msra.mxu0 0.0
    %944 = vmatprep.subr.mxu0 0.0
    %945 = vmatpush1.msra.mxu0 0.0
    %946 = vmatprep.subr.mxu0 0.0
    %947 = vmatpush1.msra.mxu0 0.0
    %948 = vmatprep.subr.mxu0 0.0
    %949 = vmatpush1.msra.mxu0 0.0
    %950 = vmatprep.subr.mxu0 0.0
    %951 = vmatpush1.msra.mxu0 0.0
    %952 = vmatprep.subr.mxu0 0.0
    %953 = vmatpush1.msra.mxu0 0.0
    %954 = vmatprep.subr.mxu0 0.0
    %955 = vmatpush1.msra.mxu0 0.0
    %956 = vmatprep.subr.mxu0 0.0
    %957 = vmatpush1.msra.mxu0 0.0
    %958 = vmatprep.subr.mxu0 0.0
    %959 = vmatpush1.msra.mxu0 0.0
    %960 = vmatprep.subr.mxu0 0.0
    %961 = vmatpush1.msra.mxu0 0.0
    %962 = vmatprep.subr.mxu0 0.0
    %963 = vmatpush1.msra.mxu0 0.0
    %964 = vmatprep.subr.mxu0 0.0
    %965 = vmatpush1.msra.mxu0 0.0
    %966 = vmatprep.subr.mxu0 0.0
    %967 = vmatpush1.msra.mxu0 0.0
    %968 = vmatprep.subr.mxu0 0.0
    %969 = vmatpush1.msra.mxu0 0.0
    %970 = vmatprep.subr.mxu0 0.0
    %971 = vmatpush1.msra.mxu0 0.0
    %972 = vmatprep.subr.mxu0 0.0
    %973 = vmatpush1.msra.mxu0 0.0
    %974 = vmatprep.subr.mxu0 0.0
    %975 = vmatpush1.msra.mxu0 0.0
    %976 = vmatprep.subr.mxu0 0.0
    %977 = vmatpush1.msra.mxu0 0.0
    %978 = vmatprep.subr.mxu0 0.0
    %979 = vmatpush1.msra.mxu0 0.0
    %980 = vmatprep.subr.mxu0 0.0
    %981 = vmatpush1.msra.mxu0 0.0
    %982 = vmatprep.subr.mxu0 0.0
    %983 = vmatpush1.msra.mxu0 0.0
    %984 = vmatprep.subr.mxu0 0.0
    %985 = vmatpush1.msra.mxu0 0.0
    %986 = vmatprep.mubr.f32.mxu0 0.0
    %987 = vmatmul.mubr.f32.gmra.mrb[0].mxu0 %v920
    %v988 = vpop.f32.mrb[0].mxu0
    %v989 = vadd.f32 0.0, %v988
    %v990 = vpop.f32.mrb[0].mxu0
    %991 = vdwg.mxu0
    %v992 = vadd.f32 %v193, %v989
    %v993 = vxor.u32 %v992, 2147483648
    %v994 = vmul.f32 %v993, 1.442695
    %v995 = vpow.pop %v994
    %v996 = vadd.f32 %v995, 1.0
    %v997 = vrcp.pop %v996
    %v998 = vmul.f32 1.0, %v997
    %v999 = vtanh.pop %v992
    %v1000 = vsel %vm206, %v999, %v998
    %v1001 = vmul.f32 %v1000, %v910
    %1003 = vrot.lane.b32.xlu0 %v1000, 64
    %v1004 = vpop.permute.xlu0 %1003
    %v1006 = vmul.f32 %v1000, %v1004
    %1008 = vrot.lane.b32.xlu0 %v1006, 32
    %v1009 = vpop.permute.xlu0 %1008
    %v1011 = vadd.f32 %v1001, %v1009
    %v1012 = vtanh.pop %v1011
    %1014 = vrot.lane.b32.xlu0 %v1012, 64
    %v1015 = vpop.permute.xlu0 %1014
    %v1017 = vmul.f32 %v1000, %v1015
    %1019 = vrot.lane.b32.xlu0 %v1017, 32
    %v1020 = vpop.permute.xlu0 %1019
    %1022 = vst.msk [vmem:[#allocation6] sm:$0xff] %vm207, %v1020
    %1024 = vrot.lane.b32.xlu0 %v1011, 96
    %v1025 = vpop.permute.xlu0 %1024
    %1027 = vst.msk [vmem:[#allocation8] sm:$0xff] %vm207, %v1025
    %v1028 = vld [vmem:[%s6] sm:$0xff]
    %v1029 = vld [vmem:[%s6 + $0x8] sm:$0xff]
    %v1030 = vld [vmem:[%s6 + $0x10] sm:$0xff]
    %v1031 = vld [vmem:[%s6 + $0x18] sm:$0xff]
    %v1032 = vld [vmem:[%s7] sm:$0x1]
    %v1034 = vlaneseq
    %v1035 = vshrl.u32 %v1034, 7
    %v1036 = vsub.s32 0, %v1035
    %v1037 = vrot.slane %v1032, %v1036
    %v1039 = vsel %vm207, %v1020, 0
    %1041 = vmatprep.subr.mxu0 0.0
    %1042 = vmatpush1.msra.mxu0 %v1028
    %1043 = vmatprep.subr.mxu0 0.0
    %1044 = vmatpush1.msra.mxu0 %v1029
    %1045 = vmatprep.subr.mxu0 0.0
    %1046 = vmatpush1.msra.mxu0 %v1030
    %1047 = vmatprep.subr.mxu0 0.0
    %1048 = vmatpush1.msra.mxu0 %v1031
    %1049 = vmatprep.subr.mxu0 0.0
    %1050 = vmatpush1.msra.mxu0 0.0
    %1051 = vmatprep.subr.mxu0 0.0
    %1052 = vmatpush1.msra.mxu0 0.0
    %1053 = vmatprep.subr.mxu0 0.0
    %1054 = vmatpush1.msra.mxu0 0.0
    %1055 = vmatprep.subr.mxu0 0.0
    %1056 = vmatpush1.msra.mxu0 0.0
    %1057 = vmatprep.subr.mxu0 0.0
    %1058 = vmatpush1.msra.mxu0 0.0
    %1059 = vmatprep.subr.mxu0 0.0
    %1060 = vmatpush1.msra.mxu0 0.0
    %1061 = vmatprep.subr.mxu0 0.0
    %1062 = vmatpush1.msra.mxu0 0.0
    %1063 = vmatprep.subr.mxu0 0.0
    %1064 = vmatpush1.msra.mxu0 0.0
    %1065 = vmatprep.subr.mxu0 0.0
    %1066 = vmatpush1.msra.mxu0 0.0
    %1067 = vmatprep.subr.mxu0 0.0
    %1068 = vmatpush1.msra.mxu0 0.0
    %1069 = vmatprep.subr.mxu0 0.0
    %1070 = vmatpush1.msra.mxu0 0.0
    %1071 = vmatprep.subr.mxu0 0.0
    %1072 = vmatpush1.msra.mxu0 0.0
    %1073 = vmatprep.subr.mxu0 0.0
    %1074 = vmatpush1.msra.mxu0 0.0
    %1075 = vmatprep.subr.mxu0 0.0
    %1076 = vmatpush1.msra.mxu0 0.0
    %1077 = vmatprep.subr.mxu0 0.0
    %1078 = vmatpush1.msra.mxu0 0.0
    %1079 = vmatprep.subr.mxu0 0.0
    %1080 = vmatpush1.msra.mxu0 0.0
    %1081 = vmatprep.subr.mxu0 0.0
    %1082 = vmatpush1.msra.mxu0 0.0
    %1083 = vmatprep.subr.mxu0 0.0
    %1084 = vmatpush1.msra.mxu0 0.0
    %1085 = vmatprep.subr.mxu0 0.0
    %1086 = vmatpush1.msra.mxu0 0.0
    %1087 = vmatprep.subr.mxu0 0.0
    %1088 = vmatpush1.msra.mxu0 0.0
    %1089 = vmatprep.subr.mxu0 0.0
    %1090 = vmatpush1.msra.mxu0 0.0
    %1091 = vmatprep.subr.mxu0 0.0
    %1092 = vmatpush1.msra.mxu0 0.0
    %1093 = vmatprep.subr.mxu0 0.0
    %1094 = vmatpush1.msra.mxu0 0.0
    %1095 = vmatprep.subr.mxu0 0.0
    %1096 = vmatpush1.msra.mxu0 0.0
    %1097 = vmatprep.subr.mxu0 0.0
    %1098 = vmatpush1.msra.mxu0 0.0
    %1099 = vmatprep.subr.mxu0 0.0
    %1100 = vmatpush1.msra.mxu0 0.0
    %1101 = vmatprep.subr.mxu0 0.0
    %1102 = vmatpush1.msra.mxu0 0.0
    %1103 = vmatprep.subr.mxu0 0.0
    %1104 = vmatpush1.msra.mxu0 0.0
    %1105 = vmatprep.mubr.f32.mxu0 0.0
    %1106 = vmatmul.mubr.f32.gmra.mrb[0].mxu0 %v314
    %v1107 = vpop.f32.mrb[0].mxu0
    %v1108 = vadd.f32 %v1037, %v1107
    %v1109 = vpop.f32.mrb[0].mxu0
    %1110 = vmatprep.mubr.f32.mxu0 0.0
    %1111 = vmatmul.mubr.f32.gmra.mrb[0].mxu0 %v415
    %v1112 = vpop.f32.mrb[0].mxu0
    %v1113 = vadd.f32 %v1037, %v1112
    %v1114 = vpop.f32.mrb[0].mxu0
    %1115 = vmatprep.mubr.f32.mxu0 0.0
    %1116 = vmatmul.mubr.f32.gmra.mrb[0].mxu0 %v516
    %v1117 = vpop.f32.mrb[0].mxu0
    %v1118 = vadd.f32 %v1037, %v1117
    %v1119 = vpop.f32.mrb[0].mxu0
    %1120 = vmatprep.mubr.f32.mxu0 0.0
    %1121 = vmatmul.mubr.f32.gmra.mrb[0].mxu0 %v617
    %v1122 = vpop.f32.mrb[0].mxu0
    %v1123 = vadd.f32 %v1037, %v1122
    %v1124 = vpop.f32.mrb[0].mxu0
    %1125 = vmatprep.mubr.f32.mxu0 0.0
    %1126 = vmatmul.mubr.f32.gmra.mrb[0].mxu0 %v718
    %v1127 = vpop.f32.mrb[0].mxu0
    %v1128 = vadd.f32 %v1037, %v1127
    %v1129 = vpop.f32.mrb[0].mxu0
    %1130 = vmatprep.mubr.f32.mxu0 0.0
    %1131 = vmatmul.mubr.f32.gmra.mrb[0].mxu0 %v819
    %v1132 = vpop.f32.mrb[0].mxu0
    %v1133 = vadd.f32 %v1037, %v1132
    %v1134 = vpop.f32.mrb[0].mxu0
    %1135 = vmatprep.mubr.f32.mxu0 0.0
    %1136 = vmatmul.mubr.f32.gmra.mrb[0].mxu0 %v920
    %v1137 = vpop.f32.mrb[0].mxu0
    %v1138 = vadd.f32 %v1037, %v1137
    %v1139 = vpop.f32.mrb[0].mxu0
    %1140 = vmatprep.mubr.f32.mxu0 0.0
    %1141 = vmatmul.mubr.f32.gmra.mrb[0].mxu0 %v1039
    %v1142 = vpop.f32.mrb[0].mxu0
    %v1143 = vadd.f32 %v1037, %v1142
    %v1144 = vpop.f32.mrb[0].mxu0
    %1145 = vdwg.mxu0
    %1146 = vst [vmem:[#allocation5] sm:$0xff] %v1108
    %1147 = vst [vmem:[#allocation5 + $0x8] sm:$0xff] %v1113
    %1148 = vst [vmem:[#allocation5 + $0x10] sm:$0xff] %v1118
    %1149 = vst [vmem:[#allocation5 + $0x18] sm:$0xff] %v1123
    %1150 = vst [vmem:[#allocation5 + $0x20] sm:$0xff] %v1128
    %1151 = vst [vmem:[#allocation5 + $0x28] sm:$0xff] %v1133
    %1152 = vst [vmem:[#allocation5 + $0x30] sm:$0xff] %v1138
    %1153 = vst [vmem:[#allocation5 + $0x38] sm:$0xff] %v1143
    // Predicated region
    $region38: #{tpu_custom_call.1} parent=1 // pred_check
      _
    $region39: #{tpu_custom_call.1} parent=1 // pred_check_branch
      %1155 = sbr.rel (0) target = $region41
    $region40: #{tpu_custom_call.1} parent=1 // pred_region
      %s1157 = ssub.s32 1024, 1024
      %1158 = vsyncadd [#allocation4], %s1157
      %s1159 = sshll.u32 [#allocation5], 4
      %s1160 = int_to_ptr.vmem [resolvable:$true] %s1159
      %1165 = dma.vmem_to_hbm [thread:$0]  %s1160, 1024, %s8, [#allocation4], 128, 128, 8
    $region41: #{tpu_custom_call.1} parent=1 // pred_fallthru
      _
    // Predicated region
    $region42: #{tpu_custom_call.1} parent=1 // pred_check
      _
    $region43: #{tpu_custom_call.1} parent=1 // pred_check_branch
      %1167 = sbr.rel (0) target = $region45
    $region44: #{tpu_custom_call.1} parent=1 // pred_region
      %s1169 = ssub.s32 128, 128
      %1170 = vsyncadd [#allocation7], %s1169
      %s1172 = sshll.u32 [#allocation6], 4
      %s1173 = int_to_ptr.vmem [resolvable:$true] %s1172
      %1175 = dma.vmem_to_hbm [thread:$0]  %s1173, 128, %s9, [#allocation7]
    $region45: #{tpu_custom_call.1} parent=1 // pred_fallthru
      _
    // Predicated region
    $region46: #{tpu_custom_call.1} parent=1 // pred_check
      _
    $region47: #{tpu_custom_call.1} parent=1 // pred_check_branch
      %1177 = sbr.rel (0) target = $region49
    $region48: #{tpu_custom_call.1} parent=1 // pred_region
      %s1179 = ssub.s32 128, 128
      %1180 = vsyncadd [#allocation7], %s1179
      %s1182 = sshll.u32 [#allocation8], 4
      %s1183 = int_to_ptr.vmem [resolvable:$true] %s1182
      %1185 = dma.vmem_to_hbm [thread:$0]  %s1183, 128, %s10, [#allocation7]
    $region49: #{tpu_custom_call.1} parent=1 // pred_fallthru
      _
    // Predicated region
    $region50: #{tpu_custom_call.1} parent=1 // pred_check
      _
    $region51: #{tpu_custom_call.1} parent=1 // pred_check_branch
      %1187 = sbr.rel (0) target = $region53
    $region52: #{tpu_custom_call.1} parent=1 // pred_region
      %1188 = dma.done [#allocation4], 1024
    $region53: #{tpu_custom_call.1} parent=1 // pred_fallthru
      _
    // Predicated region
    $region54: #{tpu_custom_call.1} parent=1 // pred_check
      _
    $region55: #{tpu_custom_call.1} parent=1 // pred_check_branch
      %1190 = sbr.rel (0) target = $region57
    $region56: #{tpu_custom_call.1} parent=1 // pred_region
      %1191 = dma.done [#allocation7], 128
    $region57: #{tpu_custom_call.1} parent=1 // pred_fallthru
      _
    // Predicated region
    $region58: #{tpu_custom_call.1} parent=1 // pred_check
      _
    $region59: #{tpu_custom_call.1} parent=1 // pred_check_branch
      %1193 = sbr.rel (0) target = $region61
    $region60: #{tpu_custom_call.1} parent=1 // pred_region
      %1194 = dma.done [#allocation7], 128
    $region61: #{tpu_custom_call.1} parent=1 // pred_fallthru
      _
    %1195 = vsyncpa [#allocation3], 1
    %1196 = vsyncpa [#allocation4], 1
    %1197 = vsyncpa [#allocation7], 1

</llo_original>
